<compile_context>
chip_gen: v5e
topology: v5e:2x2
jax: 0.10.0
libtpu: 0.0.40
codegen_flags: <defaults>
</compile_context>

<pallas_src>
import functools
import math

import jax
import jax.numpy as jnp
from jax import lax
from jax.experimental import pallas as pl
from jax.experimental.pallas import tpu as pltpu

_LANE = 128


def _gelu_exact(x):
    # torch.nn.GELU() default is the exact (erf-based) GELU.
    return 0.5 * x * (1.0 + lax.erf(x * (1.0 / math.sqrt(2.0))))


def mlp_kernel(x_ref, w1_ref, b1_ref, w2_ref, b2_ref, o_ref, *, chunk, num_chunks):
    """Channels on the sublane axis, tokens on the lane axis.

    x_ref:  (Cin,  TM)    w1_ref: (Chid, Cin)   b1_ref: (Chid, 1)
    o_ref:  (Cout, TM)    w2_ref: (Cout, Chid)  b2_ref: (Cout, 1)

    The TM-token tile is processed in lane sub-chunks of `chunk` so the live
    f32 hidden (Chid x chunk) plus erf temporaries stay inside the vreg file
    instead of spilling to VMEM.
    """
    w1 = w1_ref[...]
    b1 = b1_ref[...]
    w2 = w2_ref[...]
    b2 = b2_ref[...]

    def body(i, carry):
        start = pl.multiple_of(i * chunk, chunk)
        x = x_ref[:, pl.ds(start, chunk)]
        h = jnp.dot(w1, x, preferred_element_type=jnp.float32) + b1
        h = _gelu_exact(h)
        # nn.Dropout(0.0) is the identity -> elided.
        y = jnp.dot(w2, h, preferred_element_type=jnp.float32) + b2
        o_ref[:, pl.ds(start, chunk)] = y.astype(o_ref.dtype)
        return carry

    if num_chunks == 1:
        body(0, 0)
    else:
        lax.fori_loop(0, num_chunks, body, 0, unroll=num_chunks <= 4)


def _round_down(v, m):
    return max(m, (v // m) * m)


def mlp_pallas(x_nchw, w1, b1, w2, b2):
    """1x1-conv MLP (fc1 -> GELU -> fc2) on NCHW input.

    x_nchw: (B, Cin, H, W)
    w1: (Chid, Cin)   fc1 Conv2d 1x1 weight (squeezed to 2D)
    b1: (Chid,)       fc1 bias
    w2: (Cout, Chid)  fc2 Conv2d 1x1 weight (squeezed to 2D)
    b2: (Cout,)       fc2 bias
    returns (B, Cout, H, W)
    """
    B, Cin, H, W = x_nchw.shape
    Chid = w1.shape[0]
    Cout = w2.shape[0]
    HW = H * W
    itemsize = jnp.dtype(x_nchw.dtype).itemsize

    # NCHW -> (B, Cin, H*W): tokens already on the last (lane) axis -> no transposes.
    x_tok = x_nchw.reshape(B, Cin, HW)

    # ---- generation-aware tile sizing --------------------------------------
    vmem_cap = 128 * 1024 * 1024  # v5e/v6e physical VMEM per TC (conservative default)
    try:
        vmem_cap = int(pltpu.get_tpu_info().vmem_capacity_bytes)
    except Exception:
        pass  # interpret mode / unknown chip: keep the conservative default

    if HW < _LANE:
        tile_m = HW  # full-extent lane dim is always legal
        chunk = HW
    else:
        # Big token tiles amortize the ~0.35us per-grid-step overhead; halve the
        # target when VMEM is 64 MiB (v7x).
        target = 2048 if vmem_cap > 96 * 1024 * 1024 else 1024
        tile_m = min(_round_down(HW, _LANE), target)
        # v7x shards "parallel" grid axes over 2 TensorCores: guarantee >= 2
        # grid steps even when B == 1.
        if B == 1 and tile_m >= HW and HW >= 2 * _LANE:
            tile_m = _round_down(HW // 2, _LANE)
        # Lane sub-chunk so the live f32 hidden (Chid * chunk * 4B) <= ~128 KiB.
        chunk = min(512, _round_down((128 * 1024) // (4 * max(Chid, 1)), _LANE))
        chunk = min(chunk, tile_m)
        tile_m = (tile_m // chunk) * chunk  # exact trip count for the inner loop

    num_chunks = tile_m // chunk
    # Partial last token tile (tile_m not dividing HW) is padded/masked by
    # Pallas; token columns are independent, so that is safe.
    num_t = pl.cdiv(HW, tile_m)

    b1_2d = b1.reshape(Chid, 1)
    b2_2d = b2.reshape(Cout, 1)

    # Advisory cost estimate so XLA can schedule neighboring ops around this call.
    M = B * HW
    cost = pl.CostEstimate(
        flops=2 * M * (Cin * Chid + Chid * Cout),
        transcendentals=M * Chid,  # erf in exact GELU
        bytes_accessed=itemsize * (M * (Cin + Cout)
                                   + Chid * Cin + Cout * Chid + Chid + Cout),
    )

    kernel = functools.partial(mlp_kernel, chunk=chunk, num_chunks=num_chunks)

    def build(use_buffered_weights):
        # VMEM accounting: double-buffered x/out token tiles, weights/biases
        # (x1 with Buffered(1), x2 otherwise), and the live hidden + erf
        # temporaries (compiler scratch, counted once, not pipelined).
        weight_bufs = 1 if use_buffered_weights else 2
        vmem_bytes = (
            2 * tile_m * (Cin + Cout) * itemsize
            + weight_bufs * (Chid * Cin + Chid + Cout * Chid + Cout) * itemsize
            + 4 * Chid * chunk * 4
        )
        # Cap at 3/4 of physical VMEM (<= ~48 MiB on v7x) to leave Mosaic headroom.
        vmem_limit = int(min(vmem_cap * 3 // 4,
                             max(2 * vmem_bytes, 16 * 1024 * 1024)))

        def w_spec(shape):
            if use_buffered_weights:
                # Constant-index (resident) blocks do not need a second
                # pipeline buffer -> halves the weight VMEM footprint.
                return pl.BlockSpec(shape, lambda b, t: (0, 0),
                                    pipeline_mode=pl.Buffered(1))
            return pl.BlockSpec(shape, lambda b, t: (0, 0))

        return pl.pallas_call(
            kernel,
            out_shape=jax.ShapeDtypeStruct((B, Cout, HW), x_tok.dtype),
            grid_spec=pltpu.PrefetchScalarGridSpec(
                num_scalar_prefetch=0,
                grid=(B, num_t),
                in_specs=[
                    # x tile: (Cin, tile_m); leading batch dim squeezed out.
                    pl.BlockSpec((None, Cin, tile_m), lambda b, t: (b, 0, t)),
                    w_spec((Chid, Cin)),
                    w_spec((Chid, 1)),
                    w_spec((Cout, Chid)),
                    w_spec((Cout, 1)),
                ],
                out_specs=pl.BlockSpec((None, Cout, tile_m), lambda b, t: (b, 0, t)),
            ),
            compiler_params=pltpu.CompilerParams(
                dimension_semantics=("parallel", "parallel"),
                vmem_limit_bytes=vmem_limit,
            ),
            cost_estimate=cost,
        )

    try:
        out_tok = build(True)(x_tok, w1, b1_2d, w2, b2_2d)
    except Exception:
        # TODO(synk): drop this fallback once pl.Buffered(1) on resident weight
        # blocks is supported on all deployed jax versions.
        out_tok = build(False)(x_tok, w1, b1_2d, w2, b2_2d)

    # (B, Cout, H*W) -> (B, Cout, H, W): pure reshape, no transpose.
    return out_tok.reshape(B, Cout, H, W)


if __name__ == "__main__":
    # Module config: Mlp(in_features=4, hidden_features=32) -> out_features=4
    B, Cin, H, W = 2, 4, 16, 16
    Chid, Cout = 32, 4

    key = jax.random.PRNGKey(0)
    kx, kw1, kb1, kw2, kb2 = jax.random.split(key, 5)

    x = jax.random.normal(kx, (B, Cin, H, W), dtype=jnp.float32)

    # Conv2d 1x1 weights stored in their natural (out_ch, in_ch) orientation.
    w1 = jax.random.normal(kw1, (Chid, Cin), dtype=jnp.float32) * 0.1
    b1 = jax.random.normal(kb1, (Chid,), dtype=jnp.float32) * 0.1
    w2 = jax.random.normal(kw2, (Cout, Chid), dtype=jnp.float32) * 0.1
    b2 = jax.random.normal(kb2, (Cout,), dtype=jnp.float32) * 0.1

    out = mlp_pallas(x, w1, b1, w2, b2)
    out = jax.block_until_ready(out)

    # Plain-JAX reference (1x1 conv == per-pixel linear over channels).
    x_tok = x.reshape(B, Cin, H * W)
    h_ref = _gelu_exact(jnp.einsum("oc,bcm->bom", w1, x_tok) + b1[None, :, None])
    y_ref = jnp.einsum("oc,bcm->bom", w2, h_ref) + b2[None, :, None]
    ref = y_ref.reshape(B, Cout, H, W)

    assert out.shape == (B, Cout, H, W)
    assert jnp.allclose(out, ref, atol=1e-4, rtol=1e-4), float(
        jnp.max(jnp.abs(out - ref)))

    print("KERNEL_OK")
</pallas_src>

<mosaic_0001>
module attributes {stable_mosaic.version = 11 : i64} {
  func.func @mlp_kernel(%arg0: i32, %arg1: i32, %arg2: memref<1x4x256xf32, #tpu.memory_space<vmem>>, %arg3: memref<32x4xf32, #tpu.memory_space<vmem>>, %arg4: memref<32x1xf32, #tpu.memory_space<vmem>>, %arg5: memref<4x32xf32, #tpu.memory_space<vmem>>, %arg6: memref<4x1xf32, #tpu.memory_space<vmem>>, %arg7: memref<1x4x256xf32, #tpu.memory_space<vmem>>) attributes {dimension_semantics = [#tpu.dimension_semantics<parallel>, #tpu.dimension_semantics<parallel>], iteration_bounds = array<i64: 2, 1>, scalar_prefetch = 0 : i64, scratch_operands = 0 : i64, tpu.core_type = #tpu.core_type<tc>, window_params = [{transform_indices = @transform_0, window_bounds = array<i64: 1, 4, 256>}, {pipeline_mode = #tpu.pipeline_mode<synchronous>, transform_indices = @transform_1, window_bounds = array<i64: 32, 4>}, {pipeline_mode = #tpu.pipeline_mode<synchronous>, transform_indices = @transform_2, window_bounds = array<i64: 32, 1>}, {pipeline_mode = #tpu.pipeline_mode<synchronous>, transform_indices = @transform_3, window_bounds = array<i64: 4, 32>}, {pipeline_mode = #tpu.pipeline_mode<synchronous>, transform_indices = @transform_4, window_bounds = array<i64: 4, 1>}, {transform_indices = @transform_5, window_bounds = array<i64: 1, 4, 256>}]} {
    %c0 = arith.constant 0 : index
    %c0_0 = arith.constant 0 : index
    %0 = vector.load %arg3[%c0, %c0_0] : memref<32x4xf32, #tpu.memory_space<vmem>>, vector<32x4xf32>
    %c0_1 = arith.constant 0 : index
    %c0_2 = arith.constant 0 : index
    %1 = vector.load %arg4[%c0_1, %c0_2] : memref<32x1xf32, #tpu.memory_space<vmem>>, vector<32x1xf32>
    %c0_3 = arith.constant 0 : index
    %c0_4 = arith.constant 0 : index
    %2 = vector.load %arg5[%c0_3, %c0_4] : memref<4x32xf32, #tpu.memory_space<vmem>>, vector<4x32xf32>
    %c0_5 = arith.constant 0 : index
    %c0_6 = arith.constant 0 : index
    %3 = vector.load %arg6[%c0_5, %c0_6] : memref<4x1xf32, #tpu.memory_space<vmem>>, vector<4x1xf32>
    %c0_i32 = arith.constant 0 : i32
    %4 = tpu.assume_multiple %c0_i32, 256 : i32
    %c0_7 = arith.constant 0 : index
    %c0_8 = arith.constant 0 : index
    %5 = arith.index_cast %4 : i32 to index
    %6 = vector.load %arg2[%c0_7, %c0_8, %5] : memref<1x4x256xf32, #tpu.memory_space<vmem>>, vector<1x4x256xf32>
    %7 = vector.shape_cast %6 : vector<1x4x256xf32> to vector<4x256xf32>
    %cst = arith.constant dense<0.000000e+00> : vector<32x256xf32>
    %8 = tpu.matmul %0, %7, %cst {dimension_numbers = #tpu.dot_dimension_numbers<[1], [0], [0], [1], [0, 0, 1, 1], [], []>} : vector<32x4xf32>, vector<4x256xf32>, vector<32x256xf32> -> vector<32x256xf32>
    %9 = vector.broadcast %1 : vector<32x1xf32> to vector<32x256xf32>
    %10 = arith.addf %8, %9 : vector<32x256xf32>
    %cst_9 = arith.constant 5.000000e-01 : f32
    %11 = vector.broadcast %cst_9 : f32 to vector<32x256xf32>
    %12 = arith.mulf %11, %10 : vector<32x256xf32>
    %cst_10 = arith.constant 0.707106769 : f32
    %13 = vector.broadcast %cst_10 : f32 to vector<32x256xf32>
    %14 = arith.mulf %10, %13 : vector<32x256xf32>
    %15 = math.erf %14 : vector<32x256xf32>
    %cst_11 = arith.constant 1.000000e+00 : f32
    %16 = vector.broadcast %cst_11 : f32 to vector<32x256xf32>
    %17 = arith.addf %16, %15 : vector<32x256xf32>
    %18 = arith.mulf %12, %17 : vector<32x256xf32>
    %cst_12 = arith.constant dense<0.000000e+00> : vector<4x256xf32>
    %19 = tpu.matmul %2, %18, %cst_12 {dimension_numbers = #tpu.dot_dimension_numbers<[1], [0], [0], [1], [0, 0, 1, 1], [], []>} : vector<4x32xf32>, vector<32x256xf32>, vector<4x256xf32> -> vector<4x256xf32>
    %20 = vector.broadcast %3 : vector<4x1xf32> to vector<4x256xf32>
    %21 = arith.addf %19, %20 : vector<4x256xf32>
    %c0_13 = arith.constant 0 : index
    %c0_14 = arith.constant 0 : index
    %22 = arith.index_cast %4 : i32 to index
    %23 = vector.load %arg7[%c0_13, %c0_14, %22] : memref<1x4x256xf32, #tpu.memory_space<vmem>>, vector<1x4x256xf32>
    %24 = vector.shape_cast %23 : vector<1x4x256xf32> to vector<4x256xf32>
    %25 = vector.shape_cast %21 : vector<4x256xf32> to vector<1x4x256xf32>
    tpu.vector_store %arg7[%c0_13, %c0_14, %22], %25 {strides = array<i32>} : memref<1x4x256xf32, #tpu.memory_space<vmem>>, vector<1x4x256xf32>,
    return
  }
  func.func @transform_0(%arg0: i32, %arg1: i32) -> (i32, i32, i32) {
    %c0_i32 = arith.constant 0 : i32
    %c0_i32_0 = arith.constant 0 : i32
    return %arg0, %c0_i32, %arg1 : i32, i32, i32
  }
  func.func @transform_1(%arg0: i32, %arg1: i32) -> (i32, i32) {
    %c0_i32 = arith.constant 0 : i32
    %c0_i32_0 = arith.constant 0 : i32
    %c0_i32_1 = arith.constant 0 : i32
    return %c0_i32, %c0_i32_0 : i32, i32
  }
  func.func @transform_2(%arg0: i32, %arg1: i32) -> (i32, i32) {
    %c0_i32 = arith.constant 0 : i32
    %c0_i32_0 = arith.constant 0 : i32
    %c0_i32_1 = arith.constant 0 : i32
    return %c0_i32, %c0_i32_0 : i32, i32
  }
  func.func @transform_3(%arg0: i32, %arg1: i32) -> (i32, i32) {
    %c0_i32 = arith.constant 0 : i32
    %c0_i32_0 = arith.constant 0 : i32
    %c0_i32_1 = arith.constant 0 : i32
    return %c0_i32, %c0_i32_0 : i32, i32
  }
  func.func @transform_4(%arg0: i32, %arg1: i32) -> (i32, i32) {
    %c0_i32 = arith.constant 0 : i32
    %c0_i32_0 = arith.constant 0 : i32
    %c0_i32_1 = arith.constant 0 : i32
    return %c0_i32, %c0_i32_0 : i32, i32
  }
  func.func @transform_5(%arg0: i32, %arg1: i32) -> (i32, i32, i32) {
    %c0_i32 = arith.constant 0 : i32
    %c0_i32_0 = arith.constant 0 : i32
    return %arg0, %c0_i32, %arg1 : i32, i32, i32
  }
}

module attributes {stable_mosaic.version = 11 : i64} {
  func.func @mlp_kernel(%arg0: i32, %arg1: i32, %arg2: memref<1x4x256xf32, #tpu.memory_space<vmem>>, %arg3: memref<32x4xf32, #tpu.memory_space<vmem>>, %arg4: memref<32x1xf32, #tpu.memory_space<vmem>>, %arg5: memref<4x32xf32, #tpu.memory_space<vmem>>, %arg6: memref<4x1xf32, #tpu.memory_space<vmem>>, %arg7: memref<1x4x256xf32, #tpu.memory_space<vmem>>) attributes {dimension_semantics = [#tpu.dimension_semantics<parallel>, #tpu.dimension_semantics<parallel>], iteration_bounds = array<i64: 2, 1>, scalar_prefetch = 0 : i64, scratch_operands = 0 : i64, tpu.core_type = #tpu.core_type<tc>, window_params = [{transform_indices = @transform_0, window_bounds = array<i64: 1, 4, 256>}, {pipeline_mode = #tpu.pipeline_mode<synchronous>, transform_indices = @transform_1, window_bounds = array<i64: 32, 4>}, {pipeline_mode = #tpu.pipeline_mode<synchronous>, transform_indices = @transform_2, window_bounds = array<i64: 32, 1>}, {pipeline_mode = #tpu.pipeline_mode<synchronous>, transform_indices = @transform_3, window_bounds = array<i64: 4, 32>}, {pipeline_mode = #tpu.pipeline_mode<synchronous>, transform_indices = @transform_4, window_bounds = array<i64: 4, 1>}, {transform_indices = @transform_5, window_bounds = array<i64: 1, 4, 256>}]} {
    %c0 = arith.constant 0 : index
    %c0_0 = arith.constant 0 : index
    %0 = vector.load %arg3[%c0, %c0_0] : memref<32x4xf32, #tpu.memory_space<vmem>>, vector<32x4xf32>
    %c0_1 = arith.constant 0 : index
    %c0_2 = arith.constant 0 : index
    %1 = vector.load %arg4[%c0_1, %c0_2] : memref<32x1xf32, #tpu.memory_space<vmem>>, vector<32x1xf32>
    %c0_3 = arith.constant 0 : index
    %c0_4 = arith.constant 0 : index
    %2 = vector.load %arg5[%c0_3, %c0_4] : memref<4x32xf32, #tpu.memory_space<vmem>>, vector<4x32xf32>
    %c0_5 = arith.constant 0 : index
    %c0_6 = arith.constant 0 : index
    %3 = vector.load %arg6[%c0_5, %c0_6] : memref<4x1xf32, #tpu.memory_space<vmem>>, vector<4x1xf32>
    %c0_i32 = arith.constant 0 : i32
    %4 = tpu.assume_multiple %c0_i32, 256 : i32
    %c0_7 = arith.constant 0 : index
    %c0_8 = arith.constant 0 : index
    %5 = arith.index_cast %4 : i32 to index
    %6 = vector.load %arg2[%c0_7, %c0_8, %5] : memref<1x4x256xf32, #tpu.memory_space<vmem>>, vector<1x4x256xf32>
    %7 = vector.shape_cast %6 : vector<1x4x256xf32> to vector<4x256xf32>
    %cst = arith.constant dense<0.000000e+00> : vector<32x256xf32>
    %8 = tpu.matmul %0, %7, %cst {dimension_numbers = #tpu.dot_dimension_numbers<[1], [0], [0], [1], [0, 0, 1, 1], [], []>} : vector<32x4xf32>, vector<4x256xf32>, vector<32x256xf32> -> vector<32x256xf32>
    %9 = vector.broadcast %1 : vector<32x1xf32> to vector<32x256xf32>
    %10 = arith.addf %8, %9 : vector<32x256xf32>
    %cst_9 = arith.constant 5.000000e-01 : f32
    %11 = vector.broadcast %cst_9 : f32 to vector<32x256xf32>
    %12 = arith.mulf %11, %10 : vector<32x256xf32>
    %cst_10 = arith.constant 0.707106769 : f32
    %13 = vector.broadcast %cst_10 : f32 to vector<32x256xf32>
    %14 = arith.mulf %10, %13 : vector<32x256xf32>
    %15 = math.erf %14 : vector<32x256xf32>
    %cst_11 = arith.constant 1.000000e+00 : f32
    %16 = vector.broadcast %cst_11 : f32 to vector<32x256xf32>
    %17 = arith.addf %16, %15 : vector<32x256xf32>
    %18 = arith.mulf %12, %17 : vector<32x256xf32>
    %cst_12 = arith.constant dense<0.000000e+00> : vector<4x256xf32>
    %19 = tpu.matmul %2, %18, %cst_12 {dimension_numbers = #tpu.dot_dimension_numbers<[1], [0], [0], [1], [0, 0, 1, 1], [], []>} : vector<4x32xf32>, vector<32x256xf32>, vector<4x256xf32> -> vector<4x256xf32>
    %20 = vector.broadcast %3 : vector<4x1xf32> to vector<4x256xf32>
    %21 = arith.addf %19, %20 : vector<4x256xf32>
    %c0_13 = arith.constant 0 : index
    %c0_14 = arith.constant 0 : index
    %22 = arith.index_cast %4 : i32 to index
    %23 = vector.load %arg7[%c0_13, %c0_14, %22] : memref<1x4x256xf32, #tpu.memory_space<vmem>>, vector<1x4x256xf32>
    %24 = vector.shape_cast %23 : vector<1x4x256xf32> to vector<4x256xf32>
    %25 = vector.shape_cast %21 : vector<4x256xf32> to vector<1x4x256xf32>
    tpu.vector_store %arg7[%c0_13, %c0_14, %22], %25 {strides = array<i32>} : memref<1x4x256xf32, #tpu.memory_space<vmem>>, vector<1x4x256xf32>,
    return
  }
  func.func @transform_0(%arg0: i32, %arg1: i32) -> (i32, i32, i32) {
    %c0_i32 = arith.constant 0 : i32
    %c0_i32_0 = arith.constant 0 : i32
    return %arg0, %c0_i32, %arg1 : i32, i32, i32
  }
  func.func @transform_1(%arg0: i32, %arg1: i32) -> (i32, i32) {
    %c0_i32 = arith.constant 0 : i32
    %c0_i32_0 = arith.constant 0 : i32
    %c0_i32_1 = arith.constant 0 : i32
    return %c0_i32, %c0_i32_0 : i32, i32
  }
  func.func @transform_2(%arg0: i32, %arg1: i32) -> (i32, i32) {
    %c0_i32 = arith.constant 0 : i32
    %c0_i32_0 = arith.constant 0 : i32
    %c0_i32_1 = arith.constant 0 : i32
    return %c0_i32, %c0_i32_0 : i32, i32
  }
  func.func @transform_3(%arg0: i32, %arg1: i32) -> (i32, i32) {
    %c0_i32 = arith.constant 0 : i32
    %c0_i32_0 = arith.constant 0 : i32
    %c0_i32_1 = arith.constant 0 : i32
    return %c0_i32, %c0_i32_0 : i32, i32
  }
  func.func @transform_4(%arg0: i32, %arg1: i32) -> (i32, i32) {
    %c0_i32 = arith.constant 0 : i32
    %c0_i32_0 = arith.constant 0 : i32
    %c0_i32_1 = arith.constant 0 : i32
    return %c0_i32, %c0_i32_0 : i32, i32
  }
  func.func @transform_5(%arg0: i32, %arg1: i32) -> (i32, i32, i32) {
    %c0_i32 = arith.constant 0 : i32
    %c0_i32_0 = arith.constant 0 : i32
    return %arg0, %c0_i32, %arg1 : i32, i32, i32
  }
}

</mosaic_0001>

<llo_original>
// kernel: tpu_custom_call.1
$region0: #{tpu_custom_call.1}
  #allocation0 [shape = 'u32[]', space=smem, size = 0x4, offset = 0x4, fixed_abs, tag = 'smem constant byte address 0x4 - core index']
  #allocation1 [shape = 'u32[72,128]{1,0:T(1,128)}', space=vmem, size = 0x9000, scoped, tag = 'internal scratch']
  %s0 = inlined_call_operand.vmem [shape: f32[2,4,256], index: 0, kind: input, shape index: {}]
  %s1 = inlined_call_operand.vmem [shape: f32[32,4], index: 1, kind: input, shape index: {}]
  %s2 = inlined_call_operand.vmem [shape: f32[32,1], index: 2, kind: input, shape index: {}]
  %s3 = inlined_call_operand.vmem [shape: f32[4,32], index: 3, kind: input, shape index: {}]
  %s4 = inlined_call_operand.vmem [shape: f32[4,1], index: 4, kind: input, shape index: {}]
  %s5 = inlined_call_operand.hbm [shape: f32[2,4,256], index: 5, kind: output, shape index: {}]
  %s6 = sld [smem:[#allocation0]]
  $region53: #{tpu_custom_call.1} parent=0
    _
  %s8 = ssub.s32 1, %s6
  %s9 = scalar_select 0, %s8, %s6
  $region1: #{tpu_custom_call.1} parent=0
    #allocation2 [shape = 'u8[8192]{0}', space=vmem, size = 0x2000, scoped, tag = 'output window, operand 0']
    #allocation3 [shape = 's32[2]{0}', space=sflag, size = 0x8, scoped, tag = 'scoped memory for tpu_custom_call.1']
    %10 = vsyncpa [#allocation3], 0
    %s11 = scalar_lea.sflag [#allocation3], 1
    %12 = vsyncpa %s11, 0
    loop: start=0, step=1, limit=4
    $region2: #{tpu_custom_call.1} parent=1 // loop_pre_header
      _
    $region3: #{tpu_custom_call.1} parent=1 // loop_header
      %s14 = sphi 0, %s18
      %p15 = scmp.ge.s32.totalorder %s14, 4
      %s21 = sphi 0, %s33
      %s22 = sphi 0, %s29
      %s23 = sphi 0, %s21
      %s24 = sphi 0, %s22
      %s25 = sphi 0, %s23
      %s26 = sphi 0, %s24
      %s38 = sphi 0, %s40
      %s41 = sphi 0, %s38
      %s42 = sphi 0, %s41
      %s58 = sphi 0, %s42
      %s62 = sphi 0, %s62
      %s64 = sphi 0, %s62
      %s65 = sphi 0, %s64
      %s79 = sphi 0, %s65
      %s83 = sphi 0, %s83
      %s85 = sphi 0, %s83
      %s86 = sphi 0, %s85
      %s100 = sphi 0, %s86
      %s104 = sphi 0, %s104
      %s106 = sphi 0, %s104
      %s107 = sphi 0, %s106
      %s121 = sphi 0, %s107
      %s125 = sphi 0, %s125
      %s127 = sphi 0, %s125
      %s128 = sphi 0, %s127
      %s142 = sphi 0, %s128
      %s150 = sphi 0, %s152
      %s153 = sphi 0, %s150
      %s154 = sphi 0, %s153
      %s170 = sphi 0, %s154
    $region4: #{tpu_custom_call.1} parent=1 // loop_header_branch
      %17 = sbr.rel (%p15) target = $region8
    $region5: #{tpu_custom_call.1} parent=1 // loop_body
      %s19 = ssub.s32 %s14, 1
      %s20 = ssub.s32 %s14, 2
      %s27 = sadd.s32 1, %s22
      %p28 = scmp.ge.s32.totalorder %s27, 1
      %s29 = scalar_select %p28, 0, %s27
      %s30 = sadd.s32 1, %s21
      %s31 = scalar_select %p28, %s30, %s21
      %p32 = scmp.ge.s32.totalorder %s31, 2
      %s33 = scalar_select %p32, 0, %s31
      %s34 = ssub.s32 %s21, %s33
      %s35 = ssub.s32 %s22, %s29
      %s36 = sor.u32 %s34, %s35
      %p37 = scmp.eq.s32.totalorder %s36, 0
      %s39 = sadd.s32 %s38, 1
      %s40 = scalar_select %p37, %s38, %s39
      %p43 = pneg %p37
      %p44 = scmp.eq.s32.totalorder %s14, 1
      %p45 = por %p43, %p44
      %p46 = scmp.ne.s32.totalorder %s38, %s41
      %p47 = scmp.eq.s32.totalorder %s14, 0
      %p48 = por %p46, %p47
      %p49 = scmp.ne.s32.totalorder %s38, %s41
      %p50 = scmp.eq.s32.totalorder %s19, 1
      %p51 = por %p49, %p50
      %p52 = scmp.ne.s32.totalorder %s41, %s42
      %p53 = scmp.eq.s32.totalorder %s19, 0
      %p54 = por %p52, %p53
      %p55 = scmp.ne.s32.totalorder %s41, %s42
      %p56 = scmp.eq.s32.totalorder %s20, 1
      %p57 = por %p55, %p56
      %p59 = scmp.ne.s32.totalorder %s42, %s58
      %p60 = scmp.eq.s32.totalorder %s20, 0
      %p61 = por %p59, %p60
      %s63 = sadd.s32 %s62, 1
      %p66 = scmp.eq.s32.totalorder %s14, 1
      %p67 = scmp.ne.s32.totalorder %s62, %s64
      %p68 = scmp.eq.s32.totalorder %s14, 0
      %p69 = por %p67, %p68
      %p70 = scmp.ne.s32.totalorder %s62, %s64
      %p71 = scmp.eq.s32.totalorder %s19, 1
      %p72 = por %p70, %p71
      %p73 = scmp.ne.s32.totalorder %s64, %s65
      %p74 = scmp.eq.s32.totalorder %s19, 0
      %p75 = por %p73, %p74
      %p76 = scmp.ne.s32.totalorder %s64, %s65
      %p77 = scmp.eq.s32.totalorder %s20, 1
      %p78 = por %p76, %p77
      %p80 = scmp.ne.s32.totalorder %s65, %s79
      %p81 = scmp.eq.s32.totalorder %s20, 0
      %p82 = por %p80, %p81
      %s84 = sadd.s32 %s83, 1
      %p87 = scmp.eq.s32.totalorder %s14, 1
      %p88 = scmp.ne.s32.totalorder %s83, %s85
      %p89 = scmp.eq.s32.totalorder %s14, 0
      %p90 = por %p88, %p89
      %p91 = scmp.ne.s32.totalorder %s83, %s85
      %p92 = scmp.eq.s32.totalorder %s19, 1
      %p93 = por %p91, %p92
      %p94 = scmp.ne.s32.totalorder %s85, %s86
      %p95 = scmp.eq.s32.totalorder %s19, 0
      %p96 = por %p94, %p95
      %p97 = scmp.ne.s32.totalorder %s85, %s86
      %p98 = scmp.eq.s32.totalorder %s20, 1
      %p99 = por %p97, %p98
      %p101 = scmp.ne.s32.totalorder %s86, %s100
      %p102 = scmp.eq.s32.totalorder %s20, 0
      %p103 = por %p101, %p102
      %s105 = sadd.s32 %s104, 1
      %p108 = scmp.eq.s32.totalorder %s14, 1
      %p109 = scmp.ne.s32.totalorder %s104, %s106
      %p110 = scmp.eq.s32.totalorder %s14, 0
      %p111 = por %p109, %p110
      %p112 = scmp.ne.s32.totalorder %s104, %s106
      %p113 = scmp.eq.s32.totalorder %s19, 1
      %p114 = por %p112, %p113
      %p115 = scmp.ne.s32.totalorder %s106, %s107
      %p116 = scmp.eq.s32.totalorder %s19, 0
      %p117 = por %p115, %p116
      %p118 = scmp.ne.s32.totalorder %s106, %s107
      %p119 = scmp.eq.s32.totalorder %s20, 1
      %p120 = por %p118, %p119
      %p122 = scmp.ne.s32.totalorder %s107, %s121
      %p123 = scmp.eq.s32.totalorder %s20, 0
      %p124 = por %p122, %p123
      %s126 = sadd.s32 %s125, 1
      %p129 = scmp.eq.s32.totalorder %s14, 1
      %p130 = scmp.ne.s32.totalorder %s125, %s127
      %p131 = scmp.eq.s32.totalorder %s14, 0
      %p132 = por %p130, %p131
      %p133 = scmp.ne.s32.totalorder %s125, %s127
      %p134 = scmp.eq.s32.totalorder %s19, 1
      %p135 = por %p133, %p134
      %p136 = scmp.ne.s32.totalorder %s127, %s128
      %p137 = scmp.eq.s32.totalorder %s19, 0
      %p138 = por %p136, %p137
      %p139 = scmp.ne.s32.totalorder %s127, %s128
      %p140 = scmp.eq.s32.totalorder %s20, 1
      %p141 = por %p139, %p140
      %p143 = scmp.ne.s32.totalorder %s128, %s142
      %p144 = scmp.eq.s32.totalorder %s20, 0
      %p145 = por %p143, %p144
      %s146 = ssub.s32 %s21, %s33
      %s147 = ssub.s32 %s22, %s29
      %s148 = sor.u32 %s146, %s147
      %p149 = scmp.eq.s32.totalorder %s148, 0
      %s151 = sadd.s32 %s150, 1
      %s152 = scalar_select %p149, %s150, %s151
      %p155 = pneg %p149
      %p156 = scmp.eq.s32.totalorder %s14, 1
      %p157 = por %p155, %p156
      %p158 = scmp.ne.s32.totalorder %s150, %s153
      %p159 = scmp.eq.s32.totalorder %s14, 0
      %p160 = por %p158, %p159
      %p161 = scmp.ne.s32.totalorder %s150, %s153
      %p162 = scmp.eq.s32.totalorder %s19, 1
      %p163 = por %p161, %p162
      %p164 = scmp.ne.s32.totalorder %s153, %s154
      %p165 = scmp.eq.s32.totalorder %s19, 0
      %p166 = por %p164, %p165
      %p167 = scmp.ne.s32.totalorder %s153, %s154
      %p168 = scmp.eq.s32.totalorder %s20, 1
      %p169 = por %p167, %p168
      %p171 = scmp.ne.s32.totalorder %s154, %s170
      %p172 = scmp.eq.s32.totalorder %s20, 0
      %p173 = por %p171, %p172
      %p174 = scmp.le.s32.totalorder 1, %s14
      %p175 = scmp.lt.s32.totalorder %s14, 3
      %p176 = pnand %p174, %p175
      %p177 = pneg %p176
      // Predicated region
      $region9: #{tpu_custom_call.1} parent=5 // pred_check
        _
      $region10: #{tpu_custom_call.1} parent=5 // pred_check_branch
        %179 = sbr.rel (%p176) target = $region12
      $region11: #{tpu_custom_call.1} parent=5 // pred_region
        %s180 = ssub.s32 %s14, 1
        // Predicated region
        $region13: #{tpu_custom_call.1} parent=11 // pred_check
          %p181 = pneg %p75
        $region14: #{tpu_custom_call.1} parent=11 // pred_check_branch
          %183 = sbr.rel (%p181) target = $region16
        $region15: #{tpu_custom_call.1} parent=11 // pred_region
          _
        $region16: #{tpu_custom_call.1} parent=11 // pred_fallthru
          _
        // Predicated region
        $region17: #{tpu_custom_call.1} parent=11 // pred_check
          %p184 = pneg %p96
        $region18: #{tpu_custom_call.1} parent=11 // pred_check_branch
          %186 = sbr.rel (%p184) target = $region20
        $region19: #{tpu_custom_call.1} parent=11 // pred_region
          _
        $region20: #{tpu_custom_call.1} parent=11 // pred_fallthru
          _
        // Predicated region
        $region21: #{tpu_custom_call.1} parent=11 // pred_check
          %p187 = pneg %p117
        $region22: #{tpu_custom_call.1} parent=11 // pred_check_branch
          %189 = sbr.rel (%p187) target = $region24
        $region23: #{tpu_custom_call.1} parent=11 // pred_region
          _
        $region24: #{tpu_custom_call.1} parent=11 // pred_fallthru
          _
        // Predicated region
        $region25: #{tpu_custom_call.1} parent=11 // pred_check
          %p190 = pneg %p138
        $region26: #{tpu_custom_call.1} parent=11 // pred_check_branch
          %192 = sbr.rel (%p190) target = $region28
        $region27: #{tpu_custom_call.1} parent=11 // pred_region
          _
        $region28: #{tpu_custom_call.1} parent=11 // pred_fallthru
          _
      $region12: #{tpu_custom_call.1} parent=5 // pred_fallthru
        _
      %p193 = scmp.lt.s32.totalorder %s14, 2
      // Predicated region
      $region29: #{tpu_custom_call.1} parent=5 // pred_check
        %p194 = pneg %p193
      $region30: #{tpu_custom_call.1} parent=5 // pred_check_branch
        %196 = sbr.rel (%p194) target = $region32
      $region31: #{tpu_custom_call.1} parent=5 // pred_region
        // Predicated region
        $region33: #{tpu_custom_call.1} parent=31 // pred_check
          %p197 = pneg %p48
        $region34: #{tpu_custom_call.1} parent=31 // pred_check_branch
          %199 = sbr.rel (%p197) target = $region36
        $region35: #{tpu_custom_call.1} parent=31 // pred_region
          %s200 = smul.u32 2, %s22
          %p201 = scmp.lt.s32.totalorder %s21, 1
          %s202 = scalar_select %p201, %s21, 1
          %p203 = scmp.lt.s32.totalorder %s200, 1
          %s204 = scalar_select %p203, %s200, 1
          %s205 = smul.addr %s202, 2
          %s206 = sadd.s32 %s204, %s205
          %s207 = smul.addr %s206, 4
          %s208 = scalar_lea.vmem %s0, %s207
          %s209 = smul.u32 2, %s22
        $region36: #{tpu_custom_call.1} parent=31 // pred_fallthru
          _
      $region32: #{tpu_custom_call.1} parent=5 // pred_fallthru
        _
      %p210 = scmp.le.s32.totalorder 1, %s14
      %p211 = scmp.lt.s32.totalorder %s14, 3
      %p212 = pnand %p210, %p211
      %p213 = pneg %p212
      // Predicated region
      $region37: #{tpu_custom_call.1} parent=5 // pred_check
        _
      $region38: #{tpu_custom_call.1} parent=5 // pred_check_branch
        %215 = sbr.rel (%p212) target = $region40
      $region39: #{tpu_custom_call.1} parent=5 // pred_region
        %s216 = ssub.s32 %s14, 1
        %s217 = smul.u32 2, %s24
        %p218 = scmp.lt.s32.totalorder %s23, 1
        %s219 = scalar_select %p218, %s23, 1
        %p220 = scmp.lt.s32.totalorder %s217, 1
        %s221 = scalar_select %p220, %s217, 1
        %s222 = smul.addr %s219, 2
        %s223 = sadd.s32 %s221, %s222
        %s224 = smul.addr %s223, 4
        %s225 = scalar_lea.vmem %s0, %s224
        %p226 = pneg %p54
        %p227 = pneg %p51
        %p228 = pneg %p75
        %p229 = pneg %p72
        %p230 = pneg %p96
        %p231 = pneg %p93
        %p232 = pneg %p117
        %p233 = pneg %p114
        %p234 = pneg %p138
        %p235 = pneg %p135
        %p236 = pneg %p166
        %p237 = pneg %p163
        %s238 = sand.u32 %s153, 1
        %s239 = scalar_lea.sflag [#allocation3], %s238
        %s240 = sand.u32 %s153, 1
        %s241 = smul.addr %s240, 8
        %s242 = scalar_lea.vmem [#allocation2], %s241
        %s243 = smul.u32 2, %s24
        %p244 = scmp.lt.s32.totalorder %s23, 1
        %s245 = scalar_select %p244, %s23, 1
        %p246 = scmp.lt.s32.totalorder %s243, 1
        %s247 = scalar_select %p246, %s243, 1
        %s248 = smul.addr %s245, 2
        %s249 = sadd.s32 %s247, %s248
        %s250 = smul.addr %s249, 4
        %s251 = scalar_lea.vmem %s0, %s250
        %s252 = smul.u32 2, %s24
        %s253 = smul.u32 2, %s24
        %v254 = vld [vmem:[%s1] sm:$0xff]
        %v255 = vld [vmem:[%s1 + $0x8] sm:$0xff]
        %v256 = vld [vmem:[%s1 + $0x10] sm:$0xff]
        %v257 = vld [vmem:[%s1 + $0x18] sm:$0xff]
        %v258 = vld [vmem:[%s2] sm:$0xff]
        %v259 = vld [vmem:[%s2 + $0x8] sm:$0xff]
        %v260 = vld [vmem:[%s2 + $0x10] sm:$0xff]
        %v261 = vld [vmem:[%s2 + $0x18] sm:$0xff]
        %v262 = vld [vmem:[%s3] sm:$0xf]
        %v263 = vld [vmem:[%s4] sm:$0xf]
        %v264 = vld [vmem:[%s251] sm:$0xff]
        %266 = vset.pattern.permute.xlu0 0
        %267 = vperm.xlu0 %266, %v258
        %v268 = vpop.permute.xlu0 %267
        %271 = vset.pattern.permute.xlu0 0
        %272 = vperm.xlu0 %271, %v259
        %v273 = vpop.permute.xlu0 %272
        %276 = vset.pattern.permute.xlu0 0
        %277 = vperm.xlu0 %276, %v260
        %v278 = vpop.permute.xlu0 %277
        %281 = vset.pattern.permute.xlu0 0
        %282 = vperm.xlu0 %281, %v261
        %v283 = vpop.permute.xlu0 %282
        %286 = vst [vmem:[#allocation1] ss:$2 sm:$0xff] %v264
        %v287 = vld.sshfl [vmem:[#allocation1] sm:$0xff pattern:$0x75316420]
        %v288 = vld.sshfl [vmem:[#allocation1 + $0x8] sm:$0xff pattern:$0x75316420]
        %vm289 = vcmask 31744
        %v291 = vsel %vm289, %v254, 0
        %v294 = vsel %vm289, %v255, 0
        %v297 = vsel %vm289, %v256, 0
        %v300 = vsel %vm289, %v257, 0
        %vm302 = vcmask 1043456
        %v303 = vsel %vm302, %v287, 0
        %v305 = vsel %vm302, %v288, 0
        %307 = vmatpush.msra.mxu0 0.0
        %308 = vmatpush.msra.mxu0 0.0
        %309 = vmatpush.msra.mxu0 0.0
        %310 = vmatpush.msra.mxu0 0.0
        %311 = vmatpush.msra.mxu0 0.0
        %312 = vmatpush.msra.mxu0 0.0
        %313 = vmatpush.msra.mxu0 0.0
        %314 = vmatpush.msra.mxu0 0.0
        %315 = vmatpush.msra.mxu0 0.0
        %316 = vmatpush.msra.mxu0 0.0
        %317 = vmatpush.msra.mxu0 0.0
        %318 = vmatpush.msra.mxu0 0.0
        %319 = vmatpush.msra.mxu0 0.0
        %320 = vmatpush.msra.mxu0 0.0
        %321 = vmatpush.msra.mxu0 0.0
        %322 = vmatpush.msra.mxu0 %v303
        %323 = vmatmul.f32.gmra.mxu0 %v291
        %v324 = vpop.f32.mrf.mxu0
        %v325 = vadd.f32 %v268, %v324
        %326 = vmatmul.f32.gmra.mxu0 %v294
        %v327 = vpop.f32.mrf.mxu0
        %v328 = vadd.f32 %v273, %v327
        %329 = vmatmul.f32.gmra.mxu0 %v297
        %v330 = vpop.f32.mrf.mxu0
        %v331 = vadd.f32 %v278, %v330
        %332 = vmatmul.f32.gmra.mxu0 %v300
        %v333 = vpop.f32.mrf.mxu0
        %v334 = vadd.f32 %v283, %v333
        %335 = vdwg.mxu0
        %336 = vmatpush.msra.mxu0 0.0
        %337 = vmatpush.msra.mxu0 0.0
        %338 = vmatpush.msra.mxu0 0.0
        %339 = vmatpush.msra.mxu0 0.0
        %340 = vmatpush.msra.mxu0 0.0
        %341 = vmatpush.msra.mxu0 0.0
        %342 = vmatpush.msra.mxu0 0.0
        %343 = vmatpush.msra.mxu0 0.0
        %344 = vmatpush.msra.mxu0 0.0
        %345 = vmatpush.msra.mxu0 0.0
        %346 = vmatpush.msra.mxu0 0.0
        %347 = vmatpush.msra.mxu0 0.0
        %348 = vmatpush.msra.mxu0 0.0
        %349 = vmatpush.msra.mxu0 0.0
        %350 = vmatpush.msra.mxu0 0.0
        %351 = vmatpush.msra.mxu0 %v305
        %352 = vmatmul.f32.gmra.mxu0 %v291
        %v353 = vpop.f32.mrf.mxu0
        %v354 = vadd.f32 %v268, %v353
        %355 = vmatmul.f32.gmra.mxu0 %v294
        %v356 = vpop.f32.mrf.mxu0
        %v357 = vadd.f32 %v273, %v356
        %358 = vmatmul.f32.gmra.mxu0 %v297
        %v359 = vpop.f32.mrf.mxu0
        %v360 = vadd.f32 %v278, %v359
        %361 = vmatmul.f32.gmra.mxu0 %v300
        %v362 = vpop.f32.mrf.mxu0
        %v363 = vadd.f32 %v283, %v362
        %364 = vdwg.mxu0
        %v365 = vmul.f32 %v325, 0.5
        %v366 = vmul.f32 %v354, 0.5
        %v367 = vmul.f32 %v328, 0.5
        %v368 = vmul.f32 %v357, 0.5
        %v369 = vmul.f32 %v331, 0.5
        %v370 = vmul.f32 %v360, 0.5
        %v371 = vmul.f32 %v334, 0.5
        %v372 = vmul.f32 %v363, 0.5
        %v373 = vmul.f32 %v325, 0.70710677
        %v374 = vmul.f32 %v354, 0.70710677
        %v375 = vmul.f32 %v328, 0.70710677
        %v376 = vmul.f32 %v357, 0.70710677
        %v377 = vmul.f32 %v331, 0.70710677
        %v378 = vmul.f32 %v360, 0.70710677
        %v379 = vmul.f32 %v334, 0.70710677
        %v380 = vmul.f32 %v363, 0.70710677
        %v381 = vmul.f32 %v373, %v373
        %v382 = vmin.f32 16.0, %v381
        %v383 = vmul.f32 %v382, 2.1237322e-06
        %v384 = vadd.f32 %v383, 0.00028619796
        %v385 = vmul.f32 %v382, %v384
        %v386 = vadd.f32 %v385, 0.0036580483
        %v387 = vmul.f32 %v382, %v386
        %v388 = vadd.f32 %v387, 0.05243302
        %v389 = vmul.f32 %v382, %v388
        %v390 = vadd.f32 %v389, 0.18741608
        %v391 = vmul.f32 %v382, %v390
        %v392 = vadd.f32 %v391, 1.1283791
        %v393 = vmul.f32 %v373, %v392
        %v394 = vmul.f32 %v382, 3.8918573e-05
        %v395 = vadd.f32 %v394, 0.001143296
        %v396 = vmul.f32 %v382, %v395
        %v397 = vadd.f32 %v396, 0.014752088
        %v398 = vmul.f32 %v382, %v397
        %v399 = vadd.f32 %v398, 0.112945676
        %v400 = vmul.f32 %v382, %v399
        %v401 = vadd.f32 %v400, 0.4994258
        %v402 = vmul.f32 %v382, %v401
        %v403 = vadd.f32 %v402, 1.0
        %v404 = vrcp.pop %v403
        %v405 = vmul.f32 %v403, %v404
        %v406 = vsub.f32 1.0, %v405
        %v407 = vmul.f32 %v404, %v406
        %v408 = vadd.f32 %v404, %v407
        %vm409 = vweird.f32 %v403
        %vm410 = vweird.f32 %v404
        %vm411 = vmor %vm409, %vm410
        %v412 = vsel %vm411, %v404, %v408
        %v413 = vand.u32 2147483647, %v403
        %vm414 = vcmp.eq.f32.partialorder %v413, 8.507059e+37
        %v415 = vand.u32 %v403, 2147483648
        %v416 = vor.u32 1.1754944e-38, %v415
        %v417 = vsel %vm414, %v416, %v412
        %v418 = vmul.f32 %v393, %v417
        %v419 = vmin.f32 %v418, 1.0
        %v420 = vmax.f32 %v419, -1.0
        %v421 = vmul.f32 %v374, %v374
        %v422 = vmin.f32 16.0, %v421
        %v423 = vmul.f32 %v422, 2.1237322e-06
        %v424 = vadd.f32 %v423, 0.00028619796
        %v425 = vmul.f32 %v422, %v424
        %v426 = vadd.f32 %v425, 0.0036580483
        %v427 = vmul.f32 %v422, %v426
        %v428 = vadd.f32 %v427, 0.05243302
        %v429 = vmul.f32 %v422, %v428
        %v430 = vadd.f32 %v429, 0.18741608
        %v431 = vmul.f32 %v422, %v430
        %v432 = vadd.f32 %v431, 1.1283791
        %v433 = vmul.f32 %v374, %v432
        %v434 = vmul.f32 %v422, 3.8918573e-05
        %v435 = vadd.f32 %v434, 0.001143296
        %v436 = vmul.f32 %v422, %v435
        %v437 = vadd.f32 %v436, 0.014752088
        %v438 = vmul.f32 %v422, %v437
        %v439 = vadd.f32 %v438, 0.112945676
        %v440 = vmul.f32 %v422, %v439
        %v441 = vadd.f32 %v440, 0.4994258
        %v442 = vmul.f32 %v422, %v441
        %v443 = vadd.f32 %v442, 1.0
        %v444 = vrcp.pop %v443
        %v445 = vmul.f32 %v443, %v444
        %v446 = vsub.f32 1.0, %v445
        %v447 = vmul.f32 %v444, %v446
        %v448 = vadd.f32 %v444, %v447
        %vm449 = vweird.f32 %v443
        %vm450 = vweird.f32 %v444
        %vm451 = vmor %vm449, %vm450
        %v452 = vsel %vm451, %v444, %v448
        %v453 = vand.u32 2147483647, %v443
        %vm454 = vcmp.eq.f32.partialorder %v453, 8.507059e+37
        %v455 = vand.u32 %v443, 2147483648
        %v456 = vor.u32 1.1754944e-38, %v455
        %v457 = vsel %vm454, %v456, %v452
        %v458 = vmul.f32 %v433, %v457
        %v459 = vmin.f32 %v458, 1.0
        %v460 = vmax.f32 %v459, -1.0
        %v461 = vmul.f32 %v375, %v375
        %v462 = vmin.f32 16.0, %v461
        %v463 = vmul.f32 %v462, 2.1237322e-06
        %v464 = vadd.f32 %v463, 0.00028619796
        %v465 = vmul.f32 %v462, %v464
        %v466 = vadd.f32 %v465, 0.0036580483
        %v467 = vmul.f32 %v462, %v466
        %v468 = vadd.f32 %v467, 0.05243302
        %v469 = vmul.f32 %v462, %v468
        %v470 = vadd.f32 %v469, 0.18741608
        %v471 = vmul.f32 %v462, %v470
        %v472 = vadd.f32 %v471, 1.1283791
        %v473 = vmul.f32 %v375, %v472
        %v474 = vmul.f32 %v462, 3.8918573e-05
        %v475 = vadd.f32 %v474, 0.001143296
        %v476 = vmul.f32 %v462, %v475
        %v477 = vadd.f32 %v476, 0.014752088
        %v478 = vmul.f32 %v462, %v477
        %v479 = vadd.f32 %v478, 0.112945676
        %v480 = vmul.f32 %v462, %v479
        %v481 = vadd.f32 %v480, 0.4994258
        %v482 = vmul.f32 %v462, %v481
        %v483 = vadd.f32 %v482, 1.0
        %v484 = vrcp.pop %v483
        %v485 = vmul.f32 %v483, %v484
        %v486 = vsub.f32 1.0, %v485
        %v487 = vmul.f32 %v484, %v486
        %v488 = vadd.f32 %v484, %v487
        %vm489 = vweird.f32 %v483
        %vm490 = vweird.f32 %v484
        %vm491 = vmor %vm489, %vm490
        %v492 = vsel %vm491, %v484, %v488
        %v493 = vand.u32 2147483647, %v483
        %vm494 = vcmp.eq.f32.partialorder %v493, 8.507059e+37
        %v495 = vand.u32 %v483, 2147483648
        %v496 = vor.u32 1.1754944e-38, %v495
        %v497 = vsel %vm494, %v496, %v492
        %v498 = vmul.f32 %v473, %v497
        %v499 = vmin.f32 %v498, 1.0
        %v500 = vmax.f32 %v499, -1.0
        %v501 = vmul.f32 %v376, %v376
        %v502 = vmin.f32 16.0, %v501
        %v503 = vmul.f32 %v502, 2.1237322e-06
        %v504 = vadd.f32 %v503, 0.00028619796
        %v505 = vmul.f32 %v502, %v504
        %v506 = vadd.f32 %v505, 0.0036580483
        %v507 = vmul.f32 %v502, %v506
        %v508 = vadd.f32 %v507, 0.05243302
        %v509 = vmul.f32 %v502, %v508
        %v510 = vadd.f32 %v509, 0.18741608
        %v511 = vmul.f32 %v502, %v510
        %v512 = vadd.f32 %v511, 1.1283791
        %v513 = vmul.f32 %v376, %v512
        %v514 = vmul.f32 %v502, 3.8918573e-05
        %v515 = vadd.f32 %v514, 0.001143296
        %v516 = vmul.f32 %v502, %v515
        %v517 = vadd.f32 %v516, 0.014752088
        %v518 = vmul.f32 %v502, %v517
        %v519 = vadd.f32 %v518, 0.112945676
        %v520 = vmul.f32 %v502, %v519
        %v521 = vadd.f32 %v520, 0.4994258
        %v522 = vmul.f32 %v502, %v521
        %v523 = vadd.f32 %v522, 1.0
        %v524 = vrcp.pop %v523
        %v525 = vmul.f32 %v523, %v524
        %v526 = vsub.f32 1.0, %v525
        %v527 = vmul.f32 %v524, %v526
        %v528 = vadd.f32 %v524, %v527
        %vm529 = vweird.f32 %v523
        %vm530 = vweird.f32 %v524
        %vm531 = vmor %vm529, %vm530
        %v532 = vsel %vm531, %v524, %v528
        %v533 = vand.u32 2147483647, %v523
        %vm534 = vcmp.eq.f32.partialorder %v533, 8.507059e+37
        %v535 = vand.u32 %v523, 2147483648
        %v536 = vor.u32 1.1754944e-38, %v535
        %v537 = vsel %vm534, %v536, %v532
        %v538 = vmul.f32 %v513, %v537
        %v539 = vmin.f32 %v538, 1.0
        %v540 = vmax.f32 %v539, -1.0
        %v541 = vmul.f32 %v377, %v377
        %v542 = vmin.f32 16.0, %v541
        %v543 = vmul.f32 %v542, 2.1237322e-06
        %v544 = vadd.f32 %v543, 0.00028619796
        %v545 = vmul.f32 %v542, %v544
        %v546 = vadd.f32 %v545, 0.0036580483
        %v547 = vmul.f32 %v542, %v546
        %v548 = vadd.f32 %v547, 0.05243302
        %v549 = vmul.f32 %v542, %v548
        %v550 = vadd.f32 %v549, 0.18741608
        %v551 = vmul.f32 %v542, %v550
        %v552 = vadd.f32 %v551, 1.1283791
        %v553 = vmul.f32 %v377, %v552
        %v554 = vmul.f32 %v542, 3.8918573e-05
        %v555 = vadd.f32 %v554, 0.001143296
        %v556 = vmul.f32 %v542, %v555
        %v557 = vadd.f32 %v556, 0.014752088
        %v558 = vmul.f32 %v542, %v557
        %v559 = vadd.f32 %v558, 0.112945676
        %v560 = vmul.f32 %v542, %v559
        %v561 = vadd.f32 %v560, 0.4994258
        %v562 = vmul.f32 %v542, %v561
        %v563 = vadd.f32 %v562, 1.0
        %v564 = vrcp.pop %v563
        %v565 = vmul.f32 %v563, %v564
        %v566 = vsub.f32 1.0, %v565
        %v567 = vmul.f32 %v564, %v566
        %v568 = vadd.f32 %v564, %v567
        %vm569 = vweird.f32 %v563
        %vm570 = vweird.f32 %v564
        %vm571 = vmor %vm569, %vm570
        %v572 = vsel %vm571, %v564, %v568
        %v573 = vand.u32 2147483647, %v563
        %vm574 = vcmp.eq.f32.partialorder %v573, 8.507059e+37
        %v575 = vand.u32 %v563, 2147483648
        %v576 = vor.u32 1.1754944e-38, %v575
        %v577 = vsel %vm574, %v576, %v572
        %v578 = vmul.f32 %v553, %v577
        %v579 = vmin.f32 %v578, 1.0
        %v580 = vmax.f32 %v579, -1.0
        %v581 = vmul.f32 %v378, %v378
        %v582 = vmin.f32 16.0, %v581
        %v583 = vmul.f32 %v582, 2.1237322e-06
        %v584 = vadd.f32 %v583, 0.00028619796
        %v585 = vmul.f32 %v582, %v584
        %v586 = vadd.f32 %v585, 0.0036580483
        %v587 = vmul.f32 %v582, %v586
        %v588 = vadd.f32 %v587, 0.05243302
        %v589 = vmul.f32 %v582, %v588
        %v590 = vadd.f32 %v589, 0.18741608
        %v591 = vmul.f32 %v582, %v590
        %v592 = vadd.f32 %v591, 1.1283791
        %v593 = vmul.f32 %v378, %v592
        %v594 = vmul.f32 %v582, 3.8918573e-05
        %v595 = vadd.f32 %v594, 0.001143296
        %v596 = vmul.f32 %v582, %v595
        %v597 = vadd.f32 %v596, 0.014752088
        %v598 = vmul.f32 %v582, %v597
        %v599 = vadd.f32 %v598, 0.112945676
        %v600 = vmul.f32 %v582, %v599
        %v601 = vadd.f32 %v600, 0.4994258
        %v602 = vmul.f32 %v582, %v601
        %v603 = vadd.f32 %v602, 1.0
        %v604 = vrcp.pop %v603
        %v605 = vmul.f32 %v603, %v604
        %v606 = vsub.f32 1.0, %v605
        %v607 = vmul.f32 %v604, %v606
        %v608 = vadd.f32 %v604, %v607
        %vm609 = vweird.f32 %v603
        %vm610 = vweird.f32 %v604
        %vm611 = vmor %vm609, %vm610
        %v612 = vsel %vm611, %v604, %v608
        %v613 = vand.u32 2147483647, %v603
        %vm614 = vcmp.eq.f32.partialorder %v613, 8.507059e+37
        %v615 = vand.u32 %v603, 2147483648
        %v616 = vor.u32 1.1754944e-38, %v615
        %v617 = vsel %vm614, %v616, %v612
        %v618 = vmul.f32 %v593, %v617
        %v619 = vmin.f32 %v618, 1.0
        %v620 = vmax.f32 %v619, -1.0
        %v621 = vmul.f32 %v379, %v379
        %v622 = vmin.f32 16.0, %v621
        %v623 = vmul.f32 %v622, 2.1237322e-06
        %v624 = vadd.f32 %v623, 0.00028619796
        %v625 = vmul.f32 %v622, %v624
        %v626 = vadd.f32 %v625, 0.0036580483
        %v627 = vmul.f32 %v622, %v626
        %v628 = vadd.f32 %v627, 0.05243302
        %v629 = vmul.f32 %v622, %v628
        %v630 = vadd.f32 %v629, 0.18741608
        %v631 = vmul.f32 %v622, %v630
        %v632 = vadd.f32 %v631, 1.1283791
        %v633 = vmul.f32 %v379, %v632
        %v634 = vmul.f32 %v622, 3.8918573e-05
        %v635 = vadd.f32 %v634, 0.001143296
        %v636 = vmul.f32 %v622, %v635
        %v637 = vadd.f32 %v636, 0.014752088
        %v638 = vmul.f32 %v622, %v637
        %v639 = vadd.f32 %v638, 0.112945676
        %v640 = vmul.f32 %v622, %v639
        %v641 = vadd.f32 %v640, 0.4994258
        %v642 = vmul.f32 %v622, %v641
        %v643 = vadd.f32 %v642, 1.0
        %v644 = vrcp.pop %v643
        %v645 = vmul.f32 %v643, %v644
        %v646 = vsub.f32 1.0, %v645
        %v647 = vmul.f32 %v644, %v646
        %v648 = vadd.f32 %v644, %v647
        %vm649 = vweird.f32 %v643
        %vm650 = vweird.f32 %v644
        %vm651 = vmor %vm649, %vm650
        %v652 = vsel %vm651, %v644, %v648
        %v653 = vand.u32 2147483647, %v643
        %vm654 = vcmp.eq.f32.partialorder %v653, 8.507059e+37
        %v655 = vand.u32 %v643, 2147483648
        %v656 = vor.u32 1.1754944e-38, %v655
        %v657 = vsel %vm654, %v656, %v652
        %v658 = vmul.f32 %v633, %v657
        %v659 = vmin.f32 %v658, 1.0
        %v660 = vmax.f32 %v659, -1.0
        %v661 = vmul.f32 %v380, %v380
        %v662 = vmin.f32 16.0, %v661
        %v663 = vmul.f32 %v662, 2.1237322e-06
        %v664 = vadd.f32 %v663, 0.00028619796
        %v665 = vmul.f32 %v662, %v664
        %v666 = vadd.f32 %v665, 0.0036580483
        %v667 = vmul.f32 %v662, %v666
        %v668 = vadd.f32 %v667, 0.05243302
        %v669 = vmul.f32 %v662, %v668
        %v670 = vadd.f32 %v669, 0.18741608
        %v671 = vmul.f32 %v662, %v670
        %v672 = vadd.f32 %v671, 1.1283791
        %v673 = vmul.f32 %v380, %v672
        %v674 = vmul.f32 %v662, 3.8918573e-05
        %v675 = vadd.f32 %v674, 0.001143296
        %v676 = vmul.f32 %v662, %v675
        %v677 = vadd.f32 %v676, 0.014752088
        %v678 = vmul.f32 %v662, %v677
        %v679 = vadd.f32 %v678, 0.112945676
        %v680 = vmul.f32 %v662, %v679
        %v681 = vadd.f32 %v680, 0.4994258
        %v682 = vmul.f32 %v662, %v681
        %v683 = vadd.f32 %v682, 1.0
        %v684 = vrcp.pop %v683
        %v685 = vmul.f32 %v683, %v684
        %v686 = vsub.f32 1.0, %v685
        %v687 = vmul.f32 %v684, %v686
        %v688 = vadd.f32 %v684, %v687
        %vm689 = vweird.f32 %v683
        %vm690 = vweird.f32 %v684
        %vm691 = vmor %vm689, %vm690
        %v692 = vsel %vm691, %v684, %v688
        %v693 = vand.u32 2147483647, %v683
        %vm694 = vcmp.eq.f32.partialorder %v693, 8.507059e+37
        %v695 = vand.u32 %v683, 2147483648
        %v696 = vor.u32 1.1754944e-38, %v695
        %v697 = vsel %vm694, %v696, %v692
        %v698 = vmul.f32 %v673, %v697
        %v699 = vmin.f32 %v698, 1.0
        %v700 = vmax.f32 %v699, -1.0
        %v701 = vadd.f32 %v420, 1.0
        %v702 = vadd.f32 %v460, 1.0
        %v703 = vadd.f32 %v500, 1.0
        %v704 = vadd.f32 %v540, 1.0
        %v705 = vadd.f32 %v580, 1.0
        %v706 = vadd.f32 %v620, 1.0
        %v707 = vadd.f32 %v660, 1.0
        %v708 = vadd.f32 %v700, 1.0
        %v709 = vmul.f32 %v365, %v701
        %v710 = vmul.f32 %v366, %v702
        %v711 = vmul.f32 %v367, %v703
        %v712 = vmul.f32 %v368, %v704
        %v713 = vmul.f32 %v369, %v705
        %v714 = vmul.f32 %v370, %v706
        %v715 = vmul.f32 %v371, %v707
        %v716 = vmul.f32 %v372, %v708
        %718 = vset.pattern.permute.xlu0 0
        %719 = vperm.xlu0 %718, %v263
        %v720 = vpop.permute.xlu0 %719
        %vm722 = vcmask 261120
        %v724 = vsel %vm722, %v262, 0
        %726 = vmatpush.msra.mxu0 0.0
        %727 = vmatpush.msra.mxu0 0.0
        %728 = vmatpush.msra.mxu0 0.0
        %729 = vmatpush.msra.mxu0 0.0
        %730 = vmatpush.msra.mxu0 0.0
        %731 = vmatpush.msra.mxu0 0.0
        %732 = vmatpush.msra.mxu0 0.0
        %733 = vmatpush.msra.mxu0 0.0
        %734 = vmatpush.msra.mxu0 0.0
        %735 = vmatpush.msra.mxu0 0.0
        %736 = vmatpush.msra.mxu0 0.0
        %737 = vmatpush.msra.mxu0 0.0
        %738 = vmatpush.msra.mxu0 %v715
        %739 = vmatpush.msra.mxu0 %v713
        %740 = vmatpush.msra.mxu0 %v711
        %741 = vmatpush.msra.mxu0 %v709
        %742 = vmatmul.f32.gmra.mxu0 %v724
        %v743 = vpop.f32.mrf.mxu0
        %v744 = vadd.f32 %v720, %v743
        %745 = vdwg.mxu0
        %746 = vmatpush.msra.mxu0 0.0
        %747 = vmatpush.msra.mxu0 0.0
        %748 = vmatpush.msra.mxu0 0.0
        %749 = vmatpush.msra.mxu0 0.0
        %750 = vmatpush.msra.mxu0 0.0
        %751 = vmatpush.msra.mxu0 0.0
        %752 = vmatpush.msra.mxu0 0.0
        %753 = vmatpush.msra.mxu0 0.0
        %754 = vmatpush.msra.mxu0 0.0
        %755 = vmatpush.msra.mxu0 0.0
        %756 = vmatpush.msra.mxu0 0.0
        %757 = vmatpush.msra.mxu0 0.0
        %758 = vmatpush.msra.mxu0 %v716
        %759 = vmatpush.msra.mxu0 %v714
        %760 = vmatpush.msra.mxu0 %v712
        %761 = vmatpush.msra.mxu0 %v710
        %762 = vmatmul.f32.gmra.mxu0 %v724
        %v763 = vpop.f32.mrf.mxu0
        %v764 = vadd.f32 %v720, %v763
        %765 = vdwg.mxu0
        %v768 = vrot.slane %v764, 4
        %v769 = vsel %vm302, %v744, %v768
        %771 = vst [vmem:[%s242] sm:$0xff] %v769
        %s772 = sand.u32 %s153, 1
        %s773 = scalar_lea.sflag [#allocation3], %s772
        %s774 = sand.u32 %s153, 1
        %s775 = smul.addr %s774, 8
        %s776 = scalar_lea.vmem [#allocation2], %s775
        // Predicated region
        $region41: #{tpu_custom_call.1} parent=39 // pred_check
          %p777 = pneg %p163
        $region42: #{tpu_custom_call.1} parent=39 // pred_check_branch
          %779 = sbr.rel (%p777) target = $region44
        $region43: #{tpu_custom_call.1} parent=39 // pred_region
          %s780 = smul.u32 2, %s24
          %782 = vsyncadd %s773, 0
          %s783 = smul.addr %s23, 2
          %s784 = sadd.s32 %s780, %s783
          %s785 = smul.addr %s784, 4
          %s786 = scalar_lea.hbm %s5, %s785
          %s788 = sshll.u32 %s776, 4
          %s789 = int_to_ptr.vmem [resolvable:$true] %s788
          %s790 = sshll.u32 %s786, 4
          %s791 = int_to_ptr.hbm [resolvable:$true] %s790
          %793 = dma.vmem_to_hbm [thread:$0]  %s789, 128, %s791, %s773
        $region44: #{tpu_custom_call.1} parent=39 // pred_fallthru
          _
      $region40: #{tpu_custom_call.1} parent=5 // pred_fallthru
        _
      %p794 = scmp.le.s32.totalorder 2, %s14
      // Predicated region
      $region45: #{tpu_custom_call.1} parent=5 // pred_check
        %p795 = pneg %p794
      $region46: #{tpu_custom_call.1} parent=5 // pred_check_branch
        %797 = sbr.rel (%p795) target = $region48
      $region47: #{tpu_custom_call.1} parent=5 // pred_region
        %s798 = ssub.s32 %s14, 2
        // Predicated region
        $region49: #{tpu_custom_call.1} parent=47 // pred_check
          %p799 = pneg %p169
        $region50: #{tpu_custom_call.1} parent=47 // pred_check_branch
          %801 = sbr.rel (%p799) target = $region52
        $region51: #{tpu_custom_call.1} parent=47 // pred_region
          %s802 = sand.u32 %s154, 1
          %s803 = scalar_lea.sflag [#allocation3], %s802
          %s804 = sand.u32 %s154, 1
          %s805 = smul.addr %s804, 8
          %s806 = scalar_lea.vmem [#allocation2], %s805
          %808 = dma.done %s803, 128
        $region52: #{tpu_custom_call.1} parent=47 // pred_fallthru
          _
      $region48: #{tpu_custom_call.1} parent=5 // pred_fallthru
        _
    $region6: #{tpu_custom_call.1} parent=1 // loop_footer
      %s18 = sadd.s32 1, %s14
    $region7: #{tpu_custom_call.1} parent=1 // loop_footer_branch
      %13 = sbr.rel target = $region3
    $region8: #{tpu_custom_call.1} parent=1 // loop_exit
      _
    %809 = vsyncpa [#allocation3], 1
    %s810 = scalar_lea.sflag [#allocation3], 1
    %811 = vsyncpa %s810, 1

// kernel: tpu_custom_call.1
$region0: #{tpu_custom_call.1}
  #allocation0 [shape = 'u32[]', space=smem, size = 0x4, offset = 0x4, fixed_abs, tag = 'smem constant byte address 0x4 - core index']
  #allocation1 [shape = 'u32[72,128]{1,0:T(1,128)}', space=vmem, size = 0x9000, scoped, tag = 'internal scratch']
  %s0 = inlined_call_operand.vmem [shape: f32[2,4,256], index: 0, kind: input, shape index: {}]
  %s1 = inlined_call_operand.vmem [shape: f32[32,4], index: 1, kind: input, shape index: {}]
  %s2 = inlined_call_operand.vmem [shape: f32[32,1], index: 2, kind: input, shape index: {}]
  %s3 = inlined_call_operand.vmem [shape: f32[4,32], index: 3, kind: input, shape index: {}]
  %s4 = inlined_call_operand.vmem [shape: f32[4,1], index: 4, kind: input, shape index: {}]
  %s5 = inlined_call_operand.hbm [shape: f32[2,4,256], index: 5, kind: output, shape index: {}]
  %s6 = sld [smem:[#allocation0]]
  $region53: #{tpu_custom_call.1} parent=0
    _
  %s8 = ssub.s32 1, %s6
  %s9 = scalar_select 0, %s8, %s6
  $region1: #{tpu_custom_call.1} parent=0
    #allocation2 [shape = 'u8[8192]{0}', space=vmem, size = 0x2000, scoped, tag = 'output window, operand 0']
    #allocation3 [shape = 's32[2]{0}', space=sflag, size = 0x8, scoped, tag = 'scoped memory for tpu_custom_call.1']
    %10 = vsyncpa [#allocation3], 0
    %s11 = scalar_lea.sflag [#allocation3], 1
    %12 = vsyncpa %s11, 0
    loop: start=0, step=1, limit=4
    $region2: #{tpu_custom_call.1} parent=1 // loop_pre_header
      _
    $region3: #{tpu_custom_call.1} parent=1 // loop_header
      %s14 = sphi 0, %s18
      %p15 = scmp.ge.s32.totalorder %s14, 4
      %s21 = sphi 0, %s33
      %s22 = sphi 0, %s29
      %s23 = sphi 0, %s21
      %s24 = sphi 0, %s22
      %s25 = sphi 0, %s23
      %s26 = sphi 0, %s24
      %s38 = sphi 0, %s40
      %s41 = sphi 0, %s38
      %s42 = sphi 0, %s41
      %s58 = sphi 0, %s42
      %s62 = sphi 0, %s62
      %s64 = sphi 0, %s62
      %s65 = sphi 0, %s64
      %s79 = sphi 0, %s65
      %s83 = sphi 0, %s83
      %s85 = sphi 0, %s83
      %s86 = sphi 0, %s85
      %s100 = sphi 0, %s86
      %s104 = sphi 0, %s104
      %s106 = sphi 0, %s104
      %s107 = sphi 0, %s106
      %s121 = sphi 0, %s107
      %s125 = sphi 0, %s125
      %s127 = sphi 0, %s125
      %s128 = sphi 0, %s127
      %s142 = sphi 0, %s128
      %s150 = sphi 0, %s152
      %s153 = sphi 0, %s150
      %s154 = sphi 0, %s153
      %s170 = sphi 0, %s154
    $region4: #{tpu_custom_call.1} parent=1 // loop_header_branch
      %17 = sbr.rel (%p15) target = $region8
    $region5: #{tpu_custom_call.1} parent=1 // loop_body
      %s19 = ssub.s32 %s14, 1
      %s20 = ssub.s32 %s14, 2
      %s27 = sadd.s32 1, %s22
      %p28 = scmp.ge.s32.totalorder %s27, 1
      %s29 = scalar_select %p28, 0, %s27
      %s30 = sadd.s32 1, %s21
      %s31 = scalar_select %p28, %s30, %s21
      %p32 = scmp.ge.s32.totalorder %s31, 2
      %s33 = scalar_select %p32, 0, %s31
      %s34 = ssub.s32 %s21, %s33
      %s35 = ssub.s32 %s22, %s29
      %s36 = sor.u32 %s34, %s35
      %p37 = scmp.eq.s32.totalorder %s36, 0
      %s39 = sadd.s32 %s38, 1
      %s40 = scalar_select %p37, %s38, %s39
      %p43 = pneg %p37
      %p44 = scmp.eq.s32.totalorder %s14, 1
      %p45 = por %p43, %p44
      %p46 = scmp.ne.s32.totalorder %s38, %s41
      %p47 = scmp.eq.s32.totalorder %s14, 0
      %p48 = por %p46, %p47
      %p49 = scmp.ne.s32.totalorder %s38, %s41
      %p50 = scmp.eq.s32.totalorder %s19, 1
      %p51 = por %p49, %p50
      %p52 = scmp.ne.s32.totalorder %s41, %s42
      %p53 = scmp.eq.s32.totalorder %s19, 0
      %p54 = por %p52, %p53
      %p55 = scmp.ne.s32.totalorder %s41, %s42
      %p56 = scmp.eq.s32.totalorder %s20, 1
      %p57 = por %p55, %p56
      %p59 = scmp.ne.s32.totalorder %s42, %s58
      %p60 = scmp.eq.s32.totalorder %s20, 0
      %p61 = por %p59, %p60
      %s63 = sadd.s32 %s62, 1
      %p66 = scmp.eq.s32.totalorder %s14, 1
      %p67 = scmp.ne.s32.totalorder %s62, %s64
      %p68 = scmp.eq.s32.totalorder %s14, 0
      %p69 = por %p67, %p68
      %p70 = scmp.ne.s32.totalorder %s62, %s64
      %p71 = scmp.eq.s32.totalorder %s19, 1
      %p72 = por %p70, %p71
      %p73 = scmp.ne.s32.totalorder %s64, %s65
      %p74 = scmp.eq.s32.totalorder %s19, 0
      %p75 = por %p73, %p74
      %p76 = scmp.ne.s32.totalorder %s64, %s65
      %p77 = scmp.eq.s32.totalorder %s20, 1
      %p78 = por %p76, %p77
      %p80 = scmp.ne.s32.totalorder %s65, %s79
      %p81 = scmp.eq.s32.totalorder %s20, 0
      %p82 = por %p80, %p81
      %s84 = sadd.s32 %s83, 1
      %p87 = scmp.eq.s32.totalorder %s14, 1
      %p88 = scmp.ne.s32.totalorder %s83, %s85
      %p89 = scmp.eq.s32.totalorder %s14, 0
      %p90 = por %p88, %p89
      %p91 = scmp.ne.s32.totalorder %s83, %s85
      %p92 = scmp.eq.s32.totalorder %s19, 1
      %p93 = por %p91, %p92
      %p94 = scmp.ne.s32.totalorder %s85, %s86
      %p95 = scmp.eq.s32.totalorder %s19, 0
      %p96 = por %p94, %p95
      %p97 = scmp.ne.s32.totalorder %s85, %s86
      %p98 = scmp.eq.s32.totalorder %s20, 1
      %p99 = por %p97, %p98
      %p101 = scmp.ne.s32.totalorder %s86, %s100
      %p102 = scmp.eq.s32.totalorder %s20, 0
      %p103 = por %p101, %p102
      %s105 = sadd.s32 %s104, 1
      %p108 = scmp.eq.s32.totalorder %s14, 1
      %p109 = scmp.ne.s32.totalorder %s104, %s106
      %p110 = scmp.eq.s32.totalorder %s14, 0
      %p111 = por %p109, %p110
      %p112 = scmp.ne.s32.totalorder %s104, %s106
      %p113 = scmp.eq.s32.totalorder %s19, 1
      %p114 = por %p112, %p113
      %p115 = scmp.ne.s32.totalorder %s106, %s107
      %p116 = scmp.eq.s32.totalorder %s19, 0
      %p117 = por %p115, %p116
      %p118 = scmp.ne.s32.totalorder %s106, %s107
      %p119 = scmp.eq.s32.totalorder %s20, 1
      %p120 = por %p118, %p119
      %p122 = scmp.ne.s32.totalorder %s107, %s121
      %p123 = scmp.eq.s32.totalorder %s20, 0
      %p124 = por %p122, %p123
      %s126 = sadd.s32 %s125, 1
      %p129 = scmp.eq.s32.totalorder %s14, 1
      %p130 = scmp.ne.s32.totalorder %s125, %s127
      %p131 = scmp.eq.s32.totalorder %s14, 0
      %p132 = por %p130, %p131
      %p133 = scmp.ne.s32.totalorder %s125, %s127
      %p134 = scmp.eq.s32.totalorder %s19, 1
      %p135 = por %p133, %p134
      %p136 = scmp.ne.s32.totalorder %s127, %s128
      %p137 = scmp.eq.s32.totalorder %s19, 0
      %p138 = por %p136, %p137
      %p139 = scmp.ne.s32.totalorder %s127, %s128
      %p140 = scmp.eq.s32.totalorder %s20, 1
      %p141 = por %p139, %p140
      %p143 = scmp.ne.s32.totalorder %s128, %s142
      %p144 = scmp.eq.s32.totalorder %s20, 0
      %p145 = por %p143, %p144
      %s146 = ssub.s32 %s21, %s33
      %s147 = ssub.s32 %s22, %s29
      %s148 = sor.u32 %s146, %s147
      %p149 = scmp.eq.s32.totalorder %s148, 0
      %s151 = sadd.s32 %s150, 1
      %s152 = scalar_select %p149, %s150, %s151
      %p155 = pneg %p149
      %p156 = scmp.eq.s32.totalorder %s14, 1
      %p157 = por %p155, %p156
      %p158 = scmp.ne.s32.totalorder %s150, %s153
      %p159 = scmp.eq.s32.totalorder %s14, 0
      %p160 = por %p158, %p159
      %p161 = scmp.ne.s32.totalorder %s150, %s153
      %p162 = scmp.eq.s32.totalorder %s19, 1
      %p163 = por %p161, %p162
      %p164 = scmp.ne.s32.totalorder %s153, %s154
      %p165 = scmp.eq.s32.totalorder %s19, 0
      %p166 = por %p164, %p165
      %p167 = scmp.ne.s32.totalorder %s153, %s154
      %p168 = scmp.eq.s32.totalorder %s20, 1
      %p169 = por %p167, %p168
      %p171 = scmp.ne.s32.totalorder %s154, %s170
      %p172 = scmp.eq.s32.totalorder %s20, 0
      %p173 = por %p171, %p172
      %p174 = scmp.le.s32.totalorder 1, %s14
      %p175 = scmp.lt.s32.totalorder %s14, 3
      %p176 = pnand %p174, %p175
      %p177 = pneg %p176
      // Predicated region
      $region9: #{tpu_custom_call.1} parent=5 // pred_check
        _
      $region10: #{tpu_custom_call.1} parent=5 // pred_check_branch
        %179 = sbr.rel (%p176) target = $region12
      $region11: #{tpu_custom_call.1} parent=5 // pred_region
        %s180 = ssub.s32 %s14, 1
        // Predicated region
        $region13: #{tpu_custom_call.1} parent=11 // pred_check
          %p181 = pneg %p75
        $region14: #{tpu_custom_call.1} parent=11 // pred_check_branch
          %183 = sbr.rel (%p181) target = $region16
        $region15: #{tpu_custom_call.1} parent=11 // pred_region
          _
        $region16: #{tpu_custom_call.1} parent=11 // pred_fallthru
          _
        // Predicated region
        $region17: #{tpu_custom_call.1} parent=11 // pred_check
          %p184 = pneg %p96
        $region18: #{tpu_custom_call.1} parent=11 // pred_check_branch
          %186 = sbr.rel (%p184) target = $region20
        $region19: #{tpu_custom_call.1} parent=11 // pred_region
          _
        $region20: #{tpu_custom_call.1} parent=11 // pred_fallthru
          _
        // Predicated region
        $region21: #{tpu_custom_call.1} parent=11 // pred_check
          %p187 = pneg %p117
        $region22: #{tpu_custom_call.1} parent=11 // pred_check_branch
          %189 = sbr.rel (%p187) target = $region24
        $region23: #{tpu_custom_call.1} parent=11 // pred_region
          _
        $region24: #{tpu_custom_call.1} parent=11 // pred_fallthru
          _
        // Predicated region
        $region25: #{tpu_custom_call.1} parent=11 // pred_check
          %p190 = pneg %p138
        $region26: #{tpu_custom_call.1} parent=11 // pred_check_branch
          %192 = sbr.rel (%p190) target = $region28
        $region27: #{tpu_custom_call.1} parent=11 // pred_region
          _
        $region28: #{tpu_custom_call.1} parent=11 // pred_fallthru
          _
      $region12: #{tpu_custom_call.1} parent=5 // pred_fallthru
        _
      %p193 = scmp.lt.s32.totalorder %s14, 2
      // Predicated region
      $region29: #{tpu_custom_call.1} parent=5 // pred_check
        %p194 = pneg %p193
      $region30: #{tpu_custom_call.1} parent=5 // pred_check_branch
        %196 = sbr.rel (%p194) target = $region32
      $region31: #{tpu_custom_call.1} parent=5 // pred_region
        // Predicated region
        $region33: #{tpu_custom_call.1} parent=31 // pred_check
          %p197 = pneg %p48
        $region34: #{tpu_custom_call.1} parent=31 // pred_check_branch
          %199 = sbr.rel (%p197) target = $region36
        $region35: #{tpu_custom_call.1} parent=31 // pred_region
          %s200 = smul.u32 2, %s22
          %p201 = scmp.lt.s32.totalorder %s21, 1
          %s202 = scalar_select %p201, %s21, 1
          %p203 = scmp.lt.s32.totalorder %s200, 1
          %s204 = scalar_select %p203, %s200, 1
          %s205 = smul.addr %s202, 2
          %s206 = sadd.s32 %s204, %s205
          %s207 = smul.addr %s206, 4
          %s208 = scalar_lea.vmem %s0, %s207
          %s209 = smul.u32 2, %s22
        $region36: #{tpu_custom_call.1} parent=31 // pred_fallthru
          _
      $region32: #{tpu_custom_call.1} parent=5 // pred_fallthru
        _
      %p210 = scmp.le.s32.totalorder 1, %s14
      %p211 = scmp.lt.s32.totalorder %s14, 3
      %p212 = pnand %p210, %p211
      %p213 = pneg %p212
      // Predicated region
      $region37: #{tpu_custom_call.1} parent=5 // pred_check
        _
      $region38: #{tpu_custom_call.1} parent=5 // pred_check_branch
        %215 = sbr.rel (%p212) target = $region40
      $region39: #{tpu_custom_call.1} parent=5 // pred_region
        %s216 = ssub.s32 %s14, 1
        %s217 = smul.u32 2, %s24
        %p218 = scmp.lt.s32.totalorder %s23, 1
        %s219 = scalar_select %p218, %s23, 1
        %p220 = scmp.lt.s32.totalorder %s217, 1
        %s221 = scalar_select %p220, %s217, 1
        %s222 = smul.addr %s219, 2
        %s223 = sadd.s32 %s221, %s222
        %s224 = smul.addr %s223, 4
        %s225 = scalar_lea.vmem %s0, %s224
        %p226 = pneg %p54
        %p227 = pneg %p51
        %p228 = pneg %p75
        %p229 = pneg %p72
        %p230 = pneg %p96
        %p231 = pneg %p93
        %p232 = pneg %p117
        %p233 = pneg %p114
        %p234 = pneg %p138
        %p235 = pneg %p135
        %p236 = pneg %p166
        %p237 = pneg %p163
        %s238 = sand.u32 %s153, 1
        %s239 = scalar_lea.sflag [#allocation3], %s238
        %s240 = sand.u32 %s153, 1
        %s241 = smul.addr %s240, 8
        %s242 = scalar_lea.vmem [#allocation2], %s241
        %s243 = smul.u32 2, %s24
        %p244 = scmp.lt.s32.totalorder %s23, 1
        %s245 = scalar_select %p244, %s23, 1
        %p246 = scmp.lt.s32.totalorder %s243, 1
        %s247 = scalar_select %p246, %s243, 1
        %s248 = smul.addr %s245, 2
        %s249 = sadd.s32 %s247, %s248
        %s250 = smul.addr %s249, 4
        %s251 = scalar_lea.vmem %s0, %s250
        %s252 = smul.u32 2, %s24
        %s253 = smul.u32 2, %s24
        %v254 = vld [vmem:[%s1] sm:$0xff]
        %v255 = vld [vmem:[%s1 + $0x8] sm:$0xff]
        %v256 = vld [vmem:[%s1 + $0x10] sm:$0xff]
        %v257 = vld [vmem:[%s1 + $0x18] sm:$0xff]
        %v258 = vld [vmem:[%s2] sm:$0xff]
        %v259 = vld [vmem:[%s2 + $0x8] sm:$0xff]
        %v260 = vld [vmem:[%s2 + $0x10] sm:$0xff]
        %v261 = vld [vmem:[%s2 + $0x18] sm:$0xff]
        %v262 = vld [vmem:[%s3] sm:$0xf]
        %v263 = vld [vmem:[%s4] sm:$0xf]
        %v264 = vld [vmem:[%s251] sm:$0xff]
        %266 = vset.pattern.permute.xlu0 0
        %267 = vperm.xlu0 %266, %v258
        %v268 = vpop.permute.xlu0 %267
        %271 = vset.pattern.permute.xlu0 0
        %272 = vperm.xlu0 %271, %v259
        %v273 = vpop.permute.xlu0 %272
        %276 = vset.pattern.permute.xlu0 0
        %277 = vperm.xlu0 %276, %v260
        %v278 = vpop.permute.xlu0 %277
        %281 = vset.pattern.permute.xlu0 0
        %282 = vperm.xlu0 %281, %v261
        %v283 = vpop.permute.xlu0 %282
        %286 = vst [vmem:[#allocation1] ss:$2 sm:$0xff] %v264
        %v287 = vld.sshfl [vmem:[#allocation1] sm:$0xff pattern:$0x75316420]
        %v288 = vld.sshfl [vmem:[#allocation1 + $0x8] sm:$0xff pattern:$0x75316420]
        %vm289 = vcmask 31744
        %v291 = vsel %vm289, %v254, 0
        %v294 = vsel %vm289, %v255, 0
        %v297 = vsel %vm289, %v256, 0
        %v300 = vsel %vm289, %v257, 0
        %vm302 = vcmask 1043456
        %v303 = vsel %vm302, %v287, 0
        %v305 = vsel %vm302, %v288, 0
        %307 = vmatpush.msra.mxu0 0.0
        %308 = vmatpush.msra.mxu0 0.0
        %309 = vmatpush.msra.mxu0 0.0
        %310 = vmatpush.msra.mxu0 0.0
        %311 = vmatpush.msra.mxu0 0.0
        %312 = vmatpush.msra.mxu0 0.0
        %313 = vmatpush.msra.mxu0 0.0
        %314 = vmatpush.msra.mxu0 0.0
        %315 = vmatpush.msra.mxu0 0.0
        %316 = vmatpush.msra.mxu0 0.0
        %317 = vmatpush.msra.mxu0 0.0
        %318 = vmatpush.msra.mxu0 0.0
        %319 = vmatpush.msra.mxu0 0.0
        %320 = vmatpush.msra.mxu0 0.0
        %321 = vmatpush.msra.mxu0 0.0
        %322 = vmatpush.msra.mxu0 %v303
        %323 = vmatmul.f32.gmra.mxu0 %v291
        %v324 = vpop.f32.mrf.mxu0
        %v325 = vadd.f32 %v268, %v324
        %326 = vmatmul.f32.gmra.mxu0 %v294
        %v327 = vpop.f32.mrf.mxu0
        %v328 = vadd.f32 %v273, %v327
        %329 = vmatmul.f32.gmra.mxu0 %v297
        %v330 = vpop.f32.mrf.mxu0
        %v331 = vadd.f32 %v278, %v330
        %332 = vmatmul.f32.gmra.mxu0 %v300
        %v333 = vpop.f32.mrf.mxu0
        %v334 = vadd.f32 %v283, %v333
        %335 = vdwg.mxu0
        %336 = vmatpush.msra.mxu0 0.0
        %337 = vmatpush.msra.mxu0 0.0
        %338 = vmatpush.msra.mxu0 0.0
        %339 = vmatpush.msra.mxu0 0.0
        %340 = vmatpush.msra.mxu0 0.0
        %341 = vmatpush.msra.mxu0 0.0
        %342 = vmatpush.msra.mxu0 0.0
        %343 = vmatpush.msra.mxu0 0.0
        %344 = vmatpush.msra.mxu0 0.0
        %345 = vmatpush.msra.mxu0 0.0
        %346 = vmatpush.msra.mxu0 0.0
        %347 = vmatpush.msra.mxu0 0.0
        %348 = vmatpush.msra.mxu0 0.0
        %349 = vmatpush.msra.mxu0 0.0
        %350 = vmatpush.msra.mxu0 0.0
        %351 = vmatpush.msra.mxu0 %v305
        %352 = vmatmul.f32.gmra.mxu0 %v291
        %v353 = vpop.f32.mrf.mxu0
        %v354 = vadd.f32 %v268, %v353
        %355 = vmatmul.f32.gmra.mxu0 %v294
        %v356 = vpop.f32.mrf.mxu0
        %v357 = vadd.f32 %v273, %v356
        %358 = vmatmul.f32.gmra.mxu0 %v297
        %v359 = vpop.f32.mrf.mxu0
        %v360 = vadd.f32 %v278, %v359
        %361 = vmatmul.f32.gmra.mxu0 %v300
        %v362 = vpop.f32.mrf.mxu0
        %v363 = vadd.f32 %v283, %v362
        %364 = vdwg.mxu0
        %v365 = vmul.f32 %v325, 0.5
        %v366 = vmul.f32 %v354, 0.5
        %v367 = vmul.f32 %v328, 0.5
        %v368 = vmul.f32 %v357, 0.5
        %v369 = vmul.f32 %v331, 0.5
        %v370 = vmul.f32 %v360, 0.5
        %v371 = vmul.f32 %v334, 0.5
        %v372 = vmul.f32 %v363, 0.5
        %v373 = vmul.f32 %v325, 0.70710677
        %v374 = vmul.f32 %v354, 0.70710677
        %v375 = vmul.f32 %v328, 0.70710677
        %v376 = vmul.f32 %v357, 0.70710677
        %v377 = vmul.f32 %v331, 0.70710677
        %v378 = vmul.f32 %v360, 0.70710677
        %v379 = vmul.f32 %v334, 0.70710677
        %v380 = vmul.f32 %v363, 0.70710677
        %v381 = vmul.f32 %v373, %v373
        %v382 = vmin.f32 16.0, %v381
        %v383 = vmul.f32 %v382, 2.1237322e-06
        %v384 = vadd.f32 %v383, 0.00028619796
        %v385 = vmul.f32 %v382, %v384
        %v386 = vadd.f32 %v385, 0.0036580483
        %v387 = vmul.f32 %v382, %v386
        %v388 = vadd.f32 %v387, 0.05243302
        %v389 = vmul.f32 %v382, %v388
        %v390 = vadd.f32 %v389, 0.18741608
        %v391 = vmul.f32 %v382, %v390
        %v392 = vadd.f32 %v391, 1.1283791
        %v393 = vmul.f32 %v373, %v392
        %v394 = vmul.f32 %v382, 3.8918573e-05
        %v395 = vadd.f32 %v394, 0.001143296
        %v396 = vmul.f32 %v382, %v395
        %v397 = vadd.f32 %v396, 0.014752088
        %v398 = vmul.f32 %v382, %v397
        %v399 = vadd.f32 %v398, 0.112945676
        %v400 = vmul.f32 %v382, %v399
        %v401 = vadd.f32 %v400, 0.4994258
        %v402 = vmul.f32 %v382, %v401
        %v403 = vadd.f32 %v402, 1.0
        %v404 = vrcp.pop %v403
        %v405 = vmul.f32 %v403, %v404
        %v406 = vsub.f32 1.0, %v405
        %v407 = vmul.f32 %v404, %v406
        %v408 = vadd.f32 %v404, %v407
        %vm409 = vweird.f32 %v403
        %vm410 = vweird.f32 %v404
        %vm411 = vmor %vm409, %vm410
        %v412 = vsel %vm411, %v404, %v408
        %v413 = vand.u32 2147483647, %v403
        %vm414 = vcmp.eq.f32.partialorder %v413, 8.507059e+37
        %v415 = vand.u32 %v403, 2147483648
        %v416 = vor.u32 1.1754944e-38, %v415
        %v417 = vsel %vm414, %v416, %v412
        %v418 = vmul.f32 %v393, %v417
        %v419 = vmin.f32 %v418, 1.0
        %v420 = vmax.f32 %v419, -1.0
        %v421 = vmul.f32 %v374, %v374
        %v422 = vmin.f32 16.0, %v421
        %v423 = vmul.f32 %v422, 2.1237322e-06
        %v424 = vadd.f32 %v423, 0.00028619796
        %v425 = vmul.f32 %v422, %v424
        %v426 = vadd.f32 %v425, 0.0036580483
        %v427 = vmul.f32 %v422, %v426
        %v428 = vadd.f32 %v427, 0.05243302
        %v429 = vmul.f32 %v422, %v428
        %v430 = vadd.f32 %v429, 0.18741608
        %v431 = vmul.f32 %v422, %v430
        %v432 = vadd.f32 %v431, 1.1283791
        %v433 = vmul.f32 %v374, %v432
        %v434 = vmul.f32 %v422, 3.8918573e-05
        %v435 = vadd.f32 %v434, 0.001143296
        %v436 = vmul.f32 %v422, %v435
        %v437 = vadd.f32 %v436, 0.014752088
        %v438 = vmul.f32 %v422, %v437
        %v439 = vadd.f32 %v438, 0.112945676
        %v440 = vmul.f32 %v422, %v439
        %v441 = vadd.f32 %v440, 0.4994258
        %v442 = vmul.f32 %v422, %v441
        %v443 = vadd.f32 %v442, 1.0
        %v444 = vrcp.pop %v443
        %v445 = vmul.f32 %v443, %v444
        %v446 = vsub.f32 1.0, %v445
        %v447 = vmul.f32 %v444, %v446
        %v448 = vadd.f32 %v444, %v447
        %vm449 = vweird.f32 %v443
        %vm450 = vweird.f32 %v444
        %vm451 = vmor %vm449, %vm450
        %v452 = vsel %vm451, %v444, %v448
        %v453 = vand.u32 2147483647, %v443
        %vm454 = vcmp.eq.f32.partialorder %v453, 8.507059e+37
        %v455 = vand.u32 %v443, 2147483648
        %v456 = vor.u32 1.1754944e-38, %v455
        %v457 = vsel %vm454, %v456, %v452
        %v458 = vmul.f32 %v433, %v457
        %v459 = vmin.f32 %v458, 1.0
        %v460 = vmax.f32 %v459, -1.0
        %v461 = vmul.f32 %v375, %v375
        %v462 = vmin.f32 16.0, %v461
        %v463 = vmul.f32 %v462, 2.1237322e-06
        %v464 = vadd.f32 %v463, 0.00028619796
        %v465 = vmul.f32 %v462, %v464
        %v466 = vadd.f32 %v465, 0.0036580483
        %v467 = vmul.f32 %v462, %v466
        %v468 = vadd.f32 %v467, 0.05243302
        %v469 = vmul.f32 %v462, %v468
        %v470 = vadd.f32 %v469, 0.18741608
        %v471 = vmul.f32 %v462, %v470
        %v472 = vadd.f32 %v471, 1.1283791
        %v473 = vmul.f32 %v375, %v472
        %v474 = vmul.f32 %v462, 3.8918573e-05
        %v475 = vadd.f32 %v474, 0.001143296
        %v476 = vmul.f32 %v462, %v475
        %v477 = vadd.f32 %v476, 0.014752088
        %v478 = vmul.f32 %v462, %v477
        %v479 = vadd.f32 %v478, 0.112945676
        %v480 = vmul.f32 %v462, %v479
        %v481 = vadd.f32 %v480, 0.4994258
        %v482 = vmul.f32 %v462, %v481
        %v483 = vadd.f32 %v482, 1.0
        %v484 = vrcp.pop %v483
        %v485 = vmul.f32 %v483, %v484
        %v486 = vsub.f32 1.0, %v485
        %v487 = vmul.f32 %v484, %v486
        %v488 = vadd.f32 %v484, %v487
        %vm489 = vweird.f32 %v483
        %vm490 = vweird.f32 %v484
        %vm491 = vmor %vm489, %vm490
        %v492 = vsel %vm491, %v484, %v488
        %v493 = vand.u32 2147483647, %v483
        %vm494 = vcmp.eq.f32.partialorder %v493, 8.507059e+37
        %v495 = vand.u32 %v483, 2147483648
        %v496 = vor.u32 1.1754944e-38, %v495
        %v497 = vsel %vm494, %v496, %v492
        %v498 = vmul.f32 %v473, %v497
        %v499 = vmin.f32 %v498, 1.0
        %v500 = vmax.f32 %v499, -1.0
        %v501 = vmul.f32 %v376, %v376
        %v502 = vmin.f32 16.0, %v501
        %v503 = vmul.f32 %v502, 2.1237322e-06
        %v504 = vadd.f32 %v503, 0.00028619796
        %v505 = vmul.f32 %v502, %v504
        %v506 = vadd.f32 %v505, 0.0036580483
        %v507 = vmul.f32 %v502, %v506
        %v508 = vadd.f32 %v507, 0.05243302
        %v509 = vmul.f32 %v502, %v508
        %v510 = vadd.f32 %v509, 0.18741608
        %v511 = vmul.f32 %v502, %v510
        %v512 = vadd.f32 %v511, 1.1283791
        %v513 = vmul.f32 %v376, %v512
        %v514 = vmul.f32 %v502, 3.8918573e-05
        %v515 = vadd.f32 %v514, 0.001143296
        %v516 = vmul.f32 %v502, %v515
        %v517 = vadd.f32 %v516, 0.014752088
        %v518 = vmul.f32 %v502, %v517
        %v519 = vadd.f32 %v518, 0.112945676
        %v520 = vmul.f32 %v502, %v519
        %v521 = vadd.f32 %v520, 0.4994258
        %v522 = vmul.f32 %v502, %v521
        %v523 = vadd.f32 %v522, 1.0
        %v524 = vrcp.pop %v523
        %v525 = vmul.f32 %v523, %v524
        %v526 = vsub.f32 1.0, %v525
        %v527 = vmul.f32 %v524, %v526
        %v528 = vadd.f32 %v524, %v527
        %vm529 = vweird.f32 %v523
        %vm530 = vweird.f32 %v524
        %vm531 = vmor %vm529, %vm530
        %v532 = vsel %vm531, %v524, %v528
        %v533 = vand.u32 2147483647, %v523
        %vm534 = vcmp.eq.f32.partialorder %v533, 8.507059e+37
        %v535 = vand.u32 %v523, 2147483648
        %v536 = vor.u32 1.1754944e-38, %v535
        %v537 = vsel %vm534, %v536, %v532
        %v538 = vmul.f32 %v513, %v537
        %v539 = vmin.f32 %v538, 1.0
        %v540 = vmax.f32 %v539, -1.0
        %v541 = vmul.f32 %v377, %v377
        %v542 = vmin.f32 16.0, %v541
        %v543 = vmul.f32 %v542, 2.1237322e-06
        %v544 = vadd.f32 %v543, 0.00028619796
        %v545 = vmul.f32 %v542, %v544
        %v546 = vadd.f32 %v545, 0.0036580483
        %v547 = vmul.f32 %v542, %v546
        %v548 = vadd.f32 %v547, 0.05243302
        %v549 = vmul.f32 %v542, %v548
        %v550 = vadd.f32 %v549, 0.18741608
        %v551 = vmul.f32 %v542, %v550
        %v552 = vadd.f32 %v551, 1.1283791
        %v553 = vmul.f32 %v377, %v552
        %v554 = vmul.f32 %v542, 3.8918573e-05
        %v555 = vadd.f32 %v554, 0.001143296
        %v556 = vmul.f32 %v542, %v555
        %v557 = vadd.f32 %v556, 0.014752088
        %v558 = vmul.f32 %v542, %v557
        %v559 = vadd.f32 %v558, 0.112945676
        %v560 = vmul.f32 %v542, %v559
        %v561 = vadd.f32 %v560, 0.4994258
        %v562 = vmul.f32 %v542, %v561
        %v563 = vadd.f32 %v562, 1.0
        %v564 = vrcp.pop %v563
        %v565 = vmul.f32 %v563, %v564
        %v566 = vsub.f32 1.0, %v565
        %v567 = vmul.f32 %v564, %v566
        %v568 = vadd.f32 %v564, %v567
        %vm569 = vweird.f32 %v563
        %vm570 = vweird.f32 %v564
        %vm571 = vmor %vm569, %vm570
        %v572 = vsel %vm571, %v564, %v568
        %v573 = vand.u32 2147483647, %v563
        %vm574 = vcmp.eq.f32.partialorder %v573, 8.507059e+37
        %v575 = vand.u32 %v563, 2147483648
        %v576 = vor.u32 1.1754944e-38, %v575
        %v577 = vsel %vm574, %v576, %v572
        %v578 = vmul.f32 %v553, %v577
        %v579 = vmin.f32 %v578, 1.0
        %v580 = vmax.f32 %v579, -1.0
        %v581 = vmul.f32 %v378, %v378
        %v582 = vmin.f32 16.0, %v581
        %v583 = vmul.f32 %v582, 2.1237322e-06
        %v584 = vadd.f32 %v583, 0.00028619796
        %v585 = vmul.f32 %v582, %v584
        %v586 = vadd.f32 %v585, 0.0036580483
        %v587 = vmul.f32 %v582, %v586
        %v588 = vadd.f32 %v587, 0.05243302
        %v589 = vmul.f32 %v582, %v588
        %v590 = vadd.f32 %v589, 0.18741608
        %v591 = vmul.f32 %v582, %v590
        %v592 = vadd.f32 %v591, 1.1283791
        %v593 = vmul.f32 %v378, %v592
        %v594 = vmul.f32 %v582, 3.8918573e-05
        %v595 = vadd.f32 %v594, 0.001143296
        %v596 = vmul.f32 %v582, %v595
        %v597 = vadd.f32 %v596, 0.014752088
        %v598 = vmul.f32 %v582, %v597
        %v599 = vadd.f32 %v598, 0.112945676
        %v600 = vmul.f32 %v582, %v599
        %v601 = vadd.f32 %v600, 0.4994258
        %v602 = vmul.f32 %v582, %v601
        %v603 = vadd.f32 %v602, 1.0
        %v604 = vrcp.pop %v603
        %v605 = vmul.f32 %v603, %v604
        %v606 = vsub.f32 1.0, %v605
        %v607 = vmul.f32 %v604, %v606
        %v608 = vadd.f32 %v604, %v607
        %vm609 = vweird.f32 %v603
        %vm610 = vweird.f32 %v604
        %vm611 = vmor %vm609, %vm610
        %v612 = vsel %vm611, %v604, %v608
        %v613 = vand.u32 2147483647, %v603
        %vm614 = vcmp.eq.f32.partialorder %v613, 8.507059e+37
        %v615 = vand.u32 %v603, 2147483648
        %v616 = vor.u32 1.1754944e-38, %v615
        %v617 = vsel %vm614, %v616, %v612
        %v618 = vmul.f32 %v593, %v617
        %v619 = vmin.f32 %v618, 1.0
        %v620 = vmax.f32 %v619, -1.0
        %v621 = vmul.f32 %v379, %v379
        %v622 = vmin.f32 16.0, %v621
        %v623 = vmul.f32 %v622, 2.1237322e-06
        %v624 = vadd.f32 %v623, 0.00028619796
        %v625 = vmul.f32 %v622, %v624
        %v626 = vadd.f32 %v625, 0.0036580483
        %v627 = vmul.f32 %v622, %v626
        %v628 = vadd.f32 %v627, 0.05243302
        %v629 = vmul.f32 %v622, %v628
        %v630 = vadd.f32 %v629, 0.18741608
        %v631 = vmul.f32 %v622, %v630
        %v632 = vadd.f32 %v631, 1.1283791
        %v633 = vmul.f32 %v379, %v632
        %v634 = vmul.f32 %v622, 3.8918573e-05
        %v635 = vadd.f32 %v634, 0.001143296
        %v636 = vmul.f32 %v622, %v635
        %v637 = vadd.f32 %v636, 0.014752088
        %v638 = vmul.f32 %v622, %v637
        %v639 = vadd.f32 %v638, 0.112945676
        %v640 = vmul.f32 %v622, %v639
        %v641 = vadd.f32 %v640, 0.4994258
        %v642 = vmul.f32 %v622, %v641
        %v643 = vadd.f32 %v642, 1.0
        %v644 = vrcp.pop %v643
        %v645 = vmul.f32 %v643, %v644
        %v646 = vsub.f32 1.0, %v645
        %v647 = vmul.f32 %v644, %v646
        %v648 = vadd.f32 %v644, %v647
        %vm649 = vweird.f32 %v643
        %vm650 = vweird.f32 %v644
        %vm651 = vmor %vm649, %vm650
        %v652 = vsel %vm651, %v644, %v648
        %v653 = vand.u32 2147483647, %v643
        %vm654 = vcmp.eq.f32.partialorder %v653, 8.507059e+37
        %v655 = vand.u32 %v643, 2147483648
        %v656 = vor.u32 1.1754944e-38, %v655
        %v657 = vsel %vm654, %v656, %v652
        %v658 = vmul.f32 %v633, %v657
        %v659 = vmin.f32 %v658, 1.0
        %v660 = vmax.f32 %v659, -1.0
        %v661 = vmul.f32 %v380, %v380
        %v662 = vmin.f32 16.0, %v661
        %v663 = vmul.f32 %v662, 2.1237322e-06
        %v664 = vadd.f32 %v663, 0.00028619796
        %v665 = vmul.f32 %v662, %v664
        %v666 = vadd.f32 %v665, 0.0036580483
        %v667 = vmul.f32 %v662, %v666
        %v668 = vadd.f32 %v667, 0.05243302
        %v669 = vmul.f32 %v662, %v668
        %v670 = vadd.f32 %v669, 0.18741608
        %v671 = vmul.f32 %v662, %v670
        %v672 = vadd.f32 %v671, 1.1283791
        %v673 = vmul.f32 %v380, %v672
        %v674 = vmul.f32 %v662, 3.8918573e-05
        %v675 = vadd.f32 %v674, 0.001143296
        %v676 = vmul.f32 %v662, %v675
        %v677 = vadd.f32 %v676, 0.014752088
        %v678 = vmul.f32 %v662, %v677
        %v679 = vadd.f32 %v678, 0.112945676
        %v680 = vmul.f32 %v662, %v679
        %v681 = vadd.f32 %v680, 0.4994258
        %v682 = vmul.f32 %v662, %v681
        %v683 = vadd.f32 %v682, 1.0
        %v684 = vrcp.pop %v683
        %v685 = vmul.f32 %v683, %v684
        %v686 = vsub.f32 1.0, %v685
        %v687 = vmul.f32 %v684, %v686
        %v688 = vadd.f32 %v684, %v687
        %vm689 = vweird.f32 %v683
        %vm690 = vweird.f32 %v684
        %vm691 = vmor %vm689, %vm690
        %v692 = vsel %vm691, %v684, %v688
        %v693 = vand.u32 2147483647, %v683
        %vm694 = vcmp.eq.f32.partialorder %v693, 8.507059e+37
        %v695 = vand.u32 %v683, 2147483648
        %v696 = vor.u32 1.1754944e-38, %v695
        %v697 = vsel %vm694, %v696, %v692
        %v698 = vmul.f32 %v673, %v697
        %v699 = vmin.f32 %v698, 1.0
        %v700 = vmax.f32 %v699, -1.0
        %v701 = vadd.f32 %v420, 1.0
        %v702 = vadd.f32 %v460, 1.0
        %v703 = vadd.f32 %v500, 1.0
        %v704 = vadd.f32 %v540, 1.0
        %v705 = vadd.f32 %v580, 1.0
        %v706 = vadd.f32 %v620, 1.0
        %v707 = vadd.f32 %v660, 1.0
        %v708 = vadd.f32 %v700, 1.0
        %v709 = vmul.f32 %v365, %v701
        %v710 = vmul.f32 %v366, %v702
        %v711 = vmul.f32 %v367, %v703
        %v712 = vmul.f32 %v368, %v704
        %v713 = vmul.f32 %v369, %v705
        %v714 = vmul.f32 %v370, %v706
        %v715 = vmul.f32 %v371, %v707
        %v716 = vmul.f32 %v372, %v708
        %718 = vset.pattern.permute.xlu0 0
        %719 = vperm.xlu0 %718, %v263
        %v720 = vpop.permute.xlu0 %719
        %vm722 = vcmask 261120
        %v724 = vsel %vm722, %v262, 0
        %726 = vmatpush.msra.mxu0 0.0
        %727 = vmatpush.msra.mxu0 0.0
        %728 = vmatpush.msra.mxu0 0.0
        %729 = vmatpush.msra.mxu0 0.0
        %730 = vmatpush.msra.mxu0 0.0
        %731 = vmatpush.msra.mxu0 0.0
        %732 = vmatpush.msra.mxu0 0.0
        %733 = vmatpush.msra.mxu0 0.0
        %734 = vmatpush.msra.mxu0 0.0
        %735 = vmatpush.msra.mxu0 0.0
        %736 = vmatpush.msra.mxu0 0.0
        %737 = vmatpush.msra.mxu0 0.0
        %738 = vmatpush.msra.mxu0 %v715
        %739 = vmatpush.msra.mxu0 %v713
        %740 = vmatpush.msra.mxu0 %v711
        %741 = vmatpush.msra.mxu0 %v709
        %742 = vmatmul.f32.gmra.mxu0 %v724
        %v743 = vpop.f32.mrf.mxu0
        %v744 = vadd.f32 %v720, %v743
        %745 = vdwg.mxu0
        %746 = vmatpush.msra.mxu0 0.0
        %747 = vmatpush.msra.mxu0 0.0
        %748 = vmatpush.msra.mxu0 0.0
        %749 = vmatpush.msra.mxu0 0.0
        %750 = vmatpush.msra.mxu0 0.0
        %751 = vmatpush.msra.mxu0 0.0
        %752 = vmatpush.msra.mxu0 0.0
        %753 = vmatpush.msra.mxu0 0.0
        %754 = vmatpush.msra.mxu0 0.0
        %755 = vmatpush.msra.mxu0 0.0
        %756 = vmatpush.msra.mxu0 0.0
        %757 = vmatpush.msra.mxu0 0.0
        %758 = vmatpush.msra.mxu0 %v716
        %759 = vmatpush.msra.mxu0 %v714
        %760 = vmatpush.msra.mxu0 %v712
        %761 = vmatpush.msra.mxu0 %v710
        %762 = vmatmul.f32.gmra.mxu0 %v724
        %v763 = vpop.f32.mrf.mxu0
        %v764 = vadd.f32 %v720, %v763
        %765 = vdwg.mxu0
        %v768 = vrot.slane %v764, 4
        %v769 = vsel %vm302, %v744, %v768
        %771 = vst [vmem:[%s242] sm:$0xff] %v769
        %s772 = sand.u32 %s153, 1
        %s773 = scalar_lea.sflag [#allocation3], %s772
        %s774 = sand.u32 %s153, 1
        %s775 = smul.addr %s774, 8
        %s776 = scalar_lea.vmem [#allocation2], %s775
        // Predicated region
        $region41: #{tpu_custom_call.1} parent=39 // pred_check
          %p777 = pneg %p163
        $region42: #{tpu_custom_call.1} parent=39 // pred_check_branch
          %779 = sbr.rel (%p777) target = $region44
        $region43: #{tpu_custom_call.1} parent=39 // pred_region
          %s780 = smul.u32 2, %s24
          %782 = vsyncadd %s773, 0
          %s783 = smul.addr %s23, 2
          %s784 = sadd.s32 %s780, %s783
          %s785 = smul.addr %s784, 4
          %s786 = scalar_lea.hbm %s5, %s785
          %s788 = sshll.u32 %s776, 4
          %s789 = int_to_ptr.vmem [resolvable:$true] %s788
          %s790 = sshll.u32 %s786, 4
          %s791 = int_to_ptr.hbm [resolvable:$true] %s790
          %793 = dma.vmem_to_hbm [thread:$0]  %s789, 128, %s791, %s773
        $region44: #{tpu_custom_call.1} parent=39 // pred_fallthru
          _
      $region40: #{tpu_custom_call.1} parent=5 // pred_fallthru
        _
      %p794 = scmp.le.s32.totalorder 2, %s14
      // Predicated region
      $region45: #{tpu_custom_call.1} parent=5 // pred_check
        %p795 = pneg %p794
      $region46: #{tpu_custom_call.1} parent=5 // pred_check_branch
        %797 = sbr.rel (%p795) target = $region48
      $region47: #{tpu_custom_call.1} parent=5 // pred_region
        %s798 = ssub.s32 %s14, 2
        // Predicated region
        $region49: #{tpu_custom_call.1} parent=47 // pred_check
          %p799 = pneg %p169
        $region50: #{tpu_custom_call.1} parent=47 // pred_check_branch
          %801 = sbr.rel (%p799) target = $region52
        $region51: #{tpu_custom_call.1} parent=47 // pred_region
          %s802 = sand.u32 %s154, 1
          %s803 = scalar_lea.sflag [#allocation3], %s802
          %s804 = sand.u32 %s154, 1
          %s805 = smul.addr %s804, 8
          %s806 = scalar_lea.vmem [#allocation2], %s805
          %808 = dma.done %s803, 128
        $region52: #{tpu_custom_call.1} parent=47 // pred_fallthru
          _
      $region48: #{tpu_custom_call.1} parent=5 // pred_fallthru
        _
    $region6: #{tpu_custom_call.1} parent=1 // loop_footer
      %s18 = sadd.s32 1, %s14
    $region7: #{tpu_custom_call.1} parent=1 // loop_footer_branch
      %13 = sbr.rel target = $region3
    $region8: #{tpu_custom_call.1} parent=1 // loop_exit
      _
    %809 = vsyncpa [#allocation3], 1
    %s810 = scalar_lea.sflag [#allocation3], 1
    %811 = vsyncpa %s810, 1

</llo_original>
